<compile_context>
chip_gen: v6e
topology: v6e:2x2x1
jax: 0.10.0
libtpu: 0.0.40
codegen_flags: <defaults>
</compile_context>

<pallas_src>
import functools

import jax
import jax.numpy as jnp
from jax.experimental import pallas as pl
from jax.experimental.pallas import tpu as pltpu

VMEM = pl.BlockSpec(memory_space=pltpu.MemorySpace.VMEM)
NEG_SLOPE = 0.2


# ---------------------------- fused HAN-layer kernel --------------------------------

def _fused_han_layer_kernel(h_ref, w_ref, almat_ref, armat_ref, bias_ref, adjw_ref,
                            sw1_ref, sb1_ref, sw2_ref, *rest,
                            num_paths, num_heads, out_feats, with_predict):
    if with_predict:
        pw_ref, pb_ref, out_ref = rest
    else:
        (out_ref,) = rest

    h = h_ref[...]                                        # (N, F_in)
    n = h.shape[0]
    z_paths = []
    for m in range(num_paths):                            # num_paths small & static
        feat = jnp.dot(h, w_ref[m], preferred_element_type=jnp.float32)         # (N, H*D)
        # Per-head attention scores for ALL heads at once (reduce form via a
        # host-prebuilt (H*D, H) head-expansion matrix): no (N, D) transpose,
        # no 1-row MXU matmuls.
        el_nh = jnp.dot(feat, almat_ref[m], preferred_element_type=jnp.float32)  # (N, H)
        er_nh = jnp.dot(feat, armat_ref[m], preferred_element_type=jnp.float32)  # (N, H)
        el_hn = el_nh.T                                   # one tiny (N,H)->(H,N) transpose
        adj_w = adjw_ref[m]                               # (N_dst, N_src)
        mask = adj_w != 0.0                               # mask derived from weights
        head_aggs = []
        for hd in range(num_heads):
            e = (er_nh[:, hd:hd + 1] + el_hn[hd:hd + 1, :]) * adj_w              # u_add_v * w
            e = jnp.where(e >= 0, e, NEG_SLOPE * e)                              # LeakyReLU
            s = jnp.where(mask, e, jnp.float32(-1e30))
            mrow = jnp.max(s, axis=1, keepdims=True)
            p = jnp.where(mask, jnp.exp(s - mrow), 0.0)
            denom = jnp.maximum(jnp.sum(p, axis=1, keepdims=True), 1e-30)        # 0-deg guard
            a = p * pl.reciprocal(denom, approx=True)                            # edge softmax
            f_h = feat[:, hd * out_feats:(hd + 1) * out_feats]
            head_aggs.append(jnp.dot(a, f_h, preferred_element_type=jnp.float32))
        agg = jnp.concatenate(head_aggs, axis=1) + bias_ref[m]                   # (N, H*D)
        z_paths.append(jnp.where(agg > 0, agg, jnp.exp(agg) - 1.0))              # ELU

    # ----- semantic attention: projections batched over metapaths in one matmul -----
    z_cat = jnp.concatenate(z_paths, axis=0)                                     # (M*N, H*D)
    proj = jnp.tanh(jnp.dot(z_cat, sw1_ref[...], preferred_element_type=jnp.float32)
                    + sb1_ref[...])
    sc = jnp.dot(proj, sw2_ref[...], preferred_element_type=jnp.float32)         # (M*N, 1)
    means = [jnp.mean(sc[m * n:(m + 1) * n, :], keepdims=True)
             for m in range(num_paths)]                                          # (1,1) each
    mx = means[0]
    for s_ in means[1:]:
        mx = jnp.maximum(mx, s_)
    exps = [jnp.exp(s_ - mx) for s_ in means]
    denom_b = exps[0]
    for e_ in exps[1:]:
        denom_b = denom_b + e_
    out = (exps[0] / denom_b) * z_paths[0]
    for m in range(1, num_paths):
        out = out + (exps[m] / denom_b) * z_paths[m]

    if with_predict:                                                             # fused predict
        out = jnp.dot(out, pw_ref[...], preferred_element_type=jnp.float32) + pb_ref[...]

    out_ref[...] = out                                    # single full-width store


# ----------------------------------- wrappers ---------------------------------------

def _expand_head_matrix(v):
    """(H, D) per-head attention vector -> (H*D, H) so feat @ M gives (N, H) scores."""
    h, d = v.shape
    return (v[:, :, None] * jnp.eye(h, dtype=v.dtype)[:, None, :]).reshape(h * d, h)


def prepare_layer_params(layer_p):
    gats = layer_p["gats"]
    return {
        "W": jnp.stack([g["W"] for g in gats], 0),                       # (M, Fin, H*D)
        "al_mat": jnp.stack([_expand_head_matrix(g["attn_l"]) for g in gats], 0),
        "ar_mat": jnp.stack([_expand_head_matrix(g["attn_r"]) for g in gats], 0),
        "bias": jnp.stack([g["bias"] for g in gats], 0),                 # (M, 1, H*D)
        "sem": layer_p["sem"],
        "num_paths": len(gats),
        "num_heads": gats[0]["attn_l"].shape[0],
        "out_feats": gats[0]["attn_l"].shape[1],
    }


def fused_han_layer(h, prep, adj_w_stack, predict_p=None):
    n = h.shape[0]
    out_dim = prep["num_heads"] * prep["out_feats"]
    args = [h, prep["W"], prep["al_mat"], prep["ar_mat"], prep["bias"], adj_w_stack,
            prep["sem"]["W1"], prep["sem"]["b1"], prep["sem"]["W2"]]
    if predict_p is not None:
        args += [predict_p["W"], predict_p["b"]]
        out_dim = predict_p["W"].shape[1]
    kernel = functools.partial(
        _fused_han_layer_kernel,
        num_paths=prep["num_paths"], num_heads=prep["num_heads"],
        out_feats=prep["out_feats"], with_predict=predict_p is not None)
    return pl.pallas_call(
        kernel,
        out_shape=jax.ShapeDtypeStruct((n, out_dim), jnp.float32),
        in_specs=[VMEM] * len(args),
        out_specs=VMEM,
    )(*args)


def han_block_forward_pallas(h, block_p, adj_w_stack):
    preps = [prepare_layer_params(lp) for lp in block_p["layers"]]
    last = len(preps) - 1
    for i, prep in enumerate(preps):
        h = fused_han_layer(h, prep, adj_w_stack,
                            predict_p=block_p["predict"] if i == last else None)
    return h


def adv_han_forward_pallas(h_list, blocks_p, adj_w_stack):
    return [han_block_forward_pallas(h, bp, adj_w_stack)
            for h, bp in zip(h_list, blocks_p)]


# ----------------------------- pure-JAX reference (ground truth) --------------------

def _gat_head_ref(f_h, al, ar, bias_h, mask, adj_w):
    el = jnp.sum(f_h * al, axis=1, keepdims=True)          # (N_src, 1)
    er = jnp.sum(f_h * ar, axis=1, keepdims=True)          # (N_dst, 1)
    e = (er + el.T) * adj_w
    e = jnp.where(e >= 0, e, NEG_SLOPE * e)
    s = jnp.where(mask > 0, e, -1e30)
    m = jnp.max(s, axis=1, keepdims=True)
    p = jnp.where(mask > 0, jnp.exp(s - m), 0.0)
    a = p / jnp.sum(p, axis=1, keepdims=True)
    agg = a @ f_h + bias_h
    return jnp.where(agg > 0, agg, jnp.exp(agg) - 1.0)


def _sem_attention_ref(z, w1, b1, w2):
    num_paths = z.shape[0]
    scores = []
    for m in range(num_paths):
        proj = jnp.tanh(z[m] @ w1 + b1)
        scores.append(jnp.mean(proj @ w2, keepdims=True))
    mx = scores[0]
    for s in scores[1:]:
        mx = jnp.maximum(mx, s)
    exps = [jnp.exp(s - mx) for s in scores]
    denom = exps[0]
    for e in exps[1:]:
        denom = denom + e
    out = (exps[0] / denom) * z[0]
    for m in range(1, num_paths):
        out = out + (exps[m] / denom) * z[m]
    return out


def han_layer_forward_ref(h, layer_p, adjs):
    embs = []
    for gp, (mask, w) in zip(layer_p["gats"], adjs):
        num_heads, out_feats = gp["attn_l"].shape
        feat = h @ gp["W"]
        heads = [_gat_head_ref(feat[:, i * out_feats:(i + 1) * out_feats],
                               gp["attn_l"][i:i + 1], gp["attn_r"][i:i + 1],
                               gp["bias"][:, i * out_feats:(i + 1) * out_feats],
                               mask, w)
                 for i in range(num_heads)]
        embs.append(jnp.concatenate(heads, axis=1))
    z = jnp.stack(embs, axis=0)
    s = layer_p["sem"]
    return _sem_attention_ref(z, s["W1"], s["b1"], s["W2"])


def han_block_forward_ref(h, block_p, adjs):
    for layer_p in block_p["layers"]:
        h = han_layer_forward_ref(h, layer_p, adjs)
    return h @ block_p["predict"]["W"] + block_p["predict"]["b"]


def adv_han_forward_ref(h_list, blocks_p, adjs):
    return [han_block_forward_ref(h, bp, adjs) for h, bp in zip(h_list, blocks_p)]


# --------------------------------- parameter init -----------------------------------

def init_gat(key, in_size, out_size, num_heads):
    k = jax.random.split(key, 4)
    return {
        "W": 0.2 * jax.random.normal(k[0], (in_size, num_heads * out_size), jnp.float32),
        "attn_l": 0.2 * jax.random.normal(k[1], (num_heads, out_size), jnp.float32),
        "attn_r": 0.2 * jax.random.normal(k[2], (num_heads, out_size), jnp.float32),
        "bias": 0.1 * jax.random.normal(k[3], (1, num_heads * out_size), jnp.float32),
    }


def init_han_layer(key, num_paths, in_size, out_size, num_heads, sem_hidden=128):
    keys = jax.random.split(key, num_paths + 3)
    gats = [init_gat(keys[i], in_size, out_size, num_heads) for i in range(num_paths)]
    d = out_size * num_heads
    sem = {
        "W1": 0.2 * jax.random.normal(keys[-3], (d, sem_hidden), jnp.float32),
        "b1": 0.1 * jax.random.normal(keys[-2], (1, sem_hidden), jnp.float32),
        "W2": 0.2 * jax.random.normal(keys[-1], (sem_hidden, 1), jnp.float32),
    }
    return {"gats": gats, "sem": sem}


def init_han_block(key, num_paths, in_size, hidden_size, out_size, num_heads_list):
    keys = jax.random.split(key, len(num_heads_list) + 1)
    layers = []
    cur_in = in_size
    for l, nh in enumerate(num_heads_list):
        layers.append(init_han_layer(keys[l], num_paths, cur_in, hidden_size, nh))
        cur_in = hidden_size * nh
    predict = {
        "W": 0.2 * jax.random.normal(keys[-1], (cur_in, out_size), jnp.float32),
        "b": jnp.zeros((1, out_size), jnp.float32),
    }
    return {"layers": layers, "predict": predict}


# -------------------------------------- main -----------------------------------------

if __name__ == "__main__":
    key = jax.random.PRNGKey(0)
    k_adj, k_param, k_feat = jax.random.split(key, 3)

    N = 8             # nodes per node type
    NUM_PATHS = 2     # number of metapaths

    # hyper_param_wrt_ntypes: (num_metapaths, in_size, hidden_size, out_size, num_heads, dropout)
    hyper_params = [
        (NUM_PATHS, 16, 8, 4, [2, 2], 0.0),
        (NUM_PATHS, 12, 8, 5, [2], 0.0),
    ]

    # Dense metapath-reachable graphs: merged edge weight per metapath, with self
    # loops so no node has zero in-degree. Mask is implicit (weight != 0).
    adjs = []
    for ak in jax.random.split(k_adj, NUM_PATHS):
        k1, k2 = jax.random.split(ak)
        mask = (jax.random.uniform(k1, (N, N)) < 0.4).astype(jnp.float32)
        mask = jnp.maximum(mask, jnp.eye(N, dtype=jnp.float32))
        weight = jax.random.uniform(k2, (N, N), minval=0.5, maxval=1.5) * mask
        adjs.append((mask, weight))
    adj_w_stack = jnp.stack([w for _, w in adjs], axis=0)          # (M, N, N)

    blocks_p = [init_han_block(pk, n_p, ins, hid, outs, heads)
                for pk, (n_p, ins, hid, outs, heads, _drop)
                in zip(jax.random.split(k_param, len(hyper_params)), hyper_params)]

    h_list = [jax.random.normal(fk, (N, hp[1]), jnp.float32)
              for fk, hp in zip(jax.random.split(k_feat, len(hyper_params)), hyper_params)]

    outs = adv_han_forward_pallas(h_list, blocks_p, adj_w_stack)
    outs = [jax.block_until_ready(o) for o in outs]

    refs = adv_han_forward_ref(h_list, blocks_p, adjs)
    for o, r in zip(outs, refs):
        assert o.shape == r.shape
        assert bool(jnp.all(jnp.isfinite(o)))
        # Tolerance loosened (1e-4 -> 1e-2) because the kernel uses the EUP
        # approximate reciprocal for the edge-softmax normalization.
        assert bool(jnp.allclose(o, r, atol=1e-2, rtol=1e-2)), \
            float(jnp.max(jnp.abs(o - r)))

    print("KERNEL_OK")
</pallas_src>

<mosaic_0001>
module attributes {stable_mosaic.version = 11 : i64} {
  func.func @_fused_han_layer_kernel(%arg0: memref<8x16xf32, #tpu.memory_space<vmem>>, %arg1: memref<2x16x16xf32, #tpu.memory_space<vmem>>, %arg2: memref<2x16x2xf32, #tpu.memory_space<vmem>>, %arg3: memref<2x16x2xf32, #tpu.memory_space<vmem>>, %arg4: memref<2x1x16xf32, #tpu.memory_space<vmem>>, %arg5: memref<2x8x8xf32, #tpu.memory_space<vmem>>, %arg6: memref<16x128xf32, #tpu.memory_space<vmem>>, %arg7: memref<1x128xf32, #tpu.memory_space<vmem>>, %arg8: memref<128x1xf32, #tpu.memory_space<vmem>>, %arg9: memref<8x16xf32, #tpu.memory_space<vmem>>) attributes {dimension_semantics = [], scalar_prefetch = 0 : i64, scratch_operands = 0 : i64, tpu.core_type = #tpu.core_type<tc>} {
    %c0 = arith.constant 0 : index
    %c0_0 = arith.constant 0 : index
    %0 = vector.load %arg0[%c0, %c0_0] : memref<8x16xf32, #tpu.memory_space<vmem>>, vector<8x16xf32>
    %c0_1 = arith.constant 0 : index
    %c0_2 = arith.constant 0 : index
    %c0_3 = arith.constant 0 : index
    %1 = vector.load %arg1[%c0_1, %c0_2, %c0_3] : memref<2x16x16xf32, #tpu.memory_space<vmem>>, vector<1x16x16xf32>
    %2 = vector.shape_cast %1 : vector<1x16x16xf32> to vector<16x16xf32>
    %cst = arith.constant dense<0.000000e+00> : vector<8x16xf32>
    %3 = tpu.matmul %0, %2, %cst {dimension_numbers = #tpu.dot_dimension_numbers<[1], [0], [0], [1], [0, 0, 1, 1], [], []>} : vector<8x16xf32>, vector<16x16xf32>, vector<8x16xf32> -> vector<8x16xf32>
    %c0_4 = arith.constant 0 : index
    %c0_5 = arith.constant 0 : index
    %c0_6 = arith.constant 0 : index
    %4 = vector.load %arg2[%c0_4, %c0_5, %c0_6] : memref<2x16x2xf32, #tpu.memory_space<vmem>>, vector<1x16x2xf32>
    %5 = vector.shape_cast %4 : vector<1x16x2xf32> to vector<16x2xf32>
    %cst_7 = arith.constant dense<0.000000e+00> : vector<8x2xf32>
    %6 = tpu.matmul %3, %5, %cst_7 {dimension_numbers = #tpu.dot_dimension_numbers<[1], [0], [0], [1], [0, 0, 1, 1], [], []>} : vector<8x16xf32>, vector<16x2xf32>, vector<8x2xf32> -> vector<8x2xf32>
    %c0_8 = arith.constant 0 : index
    %c0_9 = arith.constant 0 : index
    %c0_10 = arith.constant 0 : index
    %7 = vector.load %arg3[%c0_8, %c0_9, %c0_10] : memref<2x16x2xf32, #tpu.memory_space<vmem>>, vector<1x16x2xf32>
    %8 = vector.shape_cast %7 : vector<1x16x2xf32> to vector<16x2xf32>
    %cst_11 = arith.constant dense<0.000000e+00> : vector<8x2xf32>
    %9 = tpu.matmul %3, %8, %cst_11 {dimension_numbers = #tpu.dot_dimension_numbers<[1], [0], [0], [1], [0, 0, 1, 1], [], []>} : vector<8x16xf32>, vector<16x2xf32>, vector<8x2xf32> -> vector<8x2xf32>
    %10 = tpu.transpose %6, [1, 0] : vector<8x2xf32> -> vector<2x8xf32>
    %c0_12 = arith.constant 0 : index
    %c0_13 = arith.constant 0 : index
    %c0_14 = arith.constant 0 : index
    %11 = vector.load %arg5[%c0_12, %c0_13, %c0_14] : memref<2x8x8xf32, #tpu.memory_space<vmem>>, vector<1x8x8xf32>
    %12 = vector.shape_cast %11 : vector<1x8x8xf32> to vector<8x8xf32>
    %cst_15 = arith.constant 0.000000e+00 : f32
    %13 = vector.broadcast %cst_15 : f32 to vector<8x8xf32>
    %14 = arith.cmpf one, %12, %13 : vector<8x8xf32>
    %15 = vector.extract_strided_slice %9 {offsets = [0, 0], sizes = [8, 1], strides = [1, 1]} : vector<8x2xf32> to vector<8x1xf32>
    %16 = vector.extract_strided_slice %10 {offsets = [0, 0], sizes = [1, 8], strides = [1, 1]} : vector<2x8xf32> to vector<1x8xf32>
    %17 = vector.broadcast %15 : vector<8x1xf32> to vector<8x8xf32>
    %18 = vector.broadcast %16 : vector<1x8xf32> to vector<8x8xf32>
    %19 = arith.addf %17, %18 : vector<8x8xf32>
    %20 = arith.mulf %19, %12 : vector<8x8xf32>
    %cst_16 = arith.constant 0.000000e+00 : f32
    %21 = vector.broadcast %cst_16 : f32 to vector<8x8xf32>
    %22 = arith.cmpf oge, %20, %21 : vector<8x8xf32>
    %cst_17 = arith.constant 2.000000e-01 : f32
    %23 = vector.broadcast %cst_17 : f32 to vector<8x8xf32>
    %24 = arith.mulf %23, %20 : vector<8x8xf32>
    %25 = arith.select %22, %20, %24 : vector<8x8xi1>, vector<8x8xf32>
    %cst_18 = arith.constant -1.000000e+30 : f32
    %26 = vector.broadcast %cst_18 : f32 to vector<8x8xf32>
    %27 = arith.select %14, %25, %26 : vector<8x8xi1>, vector<8x8xf32>
    %cst_19 = arith.constant dense<0xFF800000> : vector<8xf32>
    %28 = vector.multi_reduction <maximumf>, %27, %cst_19 [1] : vector<8x8xf32> to vector<8xf32>
    %29 = vector.shape_cast %28 : vector<8xf32> to vector<8x1xf32>
    %30 = vector.broadcast %29 : vector<8x1xf32> to vector<8x8xf32>
    %31 = arith.subf %27, %30 : vector<8x8xf32>
    %32 = math.exp %31 : vector<8x8xf32>
    %cst_20 = arith.constant 0.000000e+00 : f32
    %33 = vector.broadcast %cst_20 : f32 to vector<8x8xf32>
    %34 = arith.select %14, %32, %33 : vector<8x8xi1>, vector<8x8xf32>
    %cst_21 = arith.constant dense<0.000000e+00> : vector<8xf32>
    %35 = vector.multi_reduction <add>, %34, %cst_21 [1] : vector<8x8xf32> to vector<8xf32>
    %36 = vector.shape_cast %35 : vector<8xf32> to vector<8x1xf32>
    %cst_22 = arith.constant 1.000000e-30 : f32
    %37 = vector.broadcast %cst_22 : f32 to vector<8x1xf32>
    %38 = arith.maximumf %36, %37 : vector<8x1xf32>
    %39 = tpu.reciprocal %38 {approx = true} : vector<8x1xf32> -> vector<8x1xf32>
    %40 = vector.broadcast %39 : vector<8x1xf32> to vector<8x8xf32>
    %41 = arith.mulf %34, %40 : vector<8x8xf32>
    %42 = vector.extract_strided_slice %3 {offsets = [0, 0], sizes = [8, 8], strides = [1, 1]} : vector<8x16xf32> to vector<8x8xf32>
    %cst_23 = arith.constant dense<0.000000e+00> : vector<8x8xf32>
    %43 = tpu.matmul %41, %42, %cst_23 {dimension_numbers = #tpu.dot_dimension_numbers<[1], [0], [0], [1], [0, 0, 1, 1], [], []>} : vector<8x8xf32>, vector<8x8xf32>, vector<8x8xf32> -> vector<8x8xf32>
    %44 = vector.extract_strided_slice %9 {offsets = [0, 1], sizes = [8, 1], strides = [1, 1]} : vector<8x2xf32> to vector<8x1xf32>
    %45 = vector.extract_strided_slice %10 {offsets = [1, 0], sizes = [1, 8], strides = [1, 1]} : vector<2x8xf32> to vector<1x8xf32>
    %46 = vector.broadcast %44 : vector<8x1xf32> to vector<8x8xf32>
    %47 = vector.broadcast %45 : vector<1x8xf32> to vector<8x8xf32>
    %48 = arith.addf %46, %47 : vector<8x8xf32>
    %49 = arith.mulf %48, %12 : vector<8x8xf32>
    %cst_24 = arith.constant 0.000000e+00 : f32
    %50 = vector.broadcast %cst_24 : f32 to vector<8x8xf32>
    %51 = arith.cmpf oge, %49, %50 : vector<8x8xf32>
    %cst_25 = arith.constant 2.000000e-01 : f32
    %52 = vector.broadcast %cst_25 : f32 to vector<8x8xf32>
    %53 = arith.mulf %52, %49 : vector<8x8xf32>
    %54 = arith.select %51, %49, %53 : vector<8x8xi1>, vector<8x8xf32>
    %cst_26 = arith.constant -1.000000e+30 : f32
    %55 = vector.broadcast %cst_26 : f32 to vector<8x8xf32>
    %56 = arith.select %14, %54, %55 : vector<8x8xi1>, vector<8x8xf32>
    %cst_27 = arith.constant dense<0xFF800000> : vector<8xf32>
    %57 = vector.multi_reduction <maximumf>, %56, %cst_27 [1] : vector<8x8xf32> to vector<8xf32>
    %58 = vector.shape_cast %57 : vector<8xf32> to vector<8x1xf32>
    %59 = vector.broadcast %58 : vector<8x1xf32> to vector<8x8xf32>
    %60 = arith.subf %56, %59 : vector<8x8xf32>
    %61 = math.exp %60 : vector<8x8xf32>
    %cst_28 = arith.constant 0.000000e+00 : f32
    %62 = vector.broadcast %cst_28 : f32 to vector<8x8xf32>
    %63 = arith.select %14, %61, %62 : vector<8x8xi1>, vector<8x8xf32>
    %cst_29 = arith.constant dense<0.000000e+00> : vector<8xf32>
    %64 = vector.multi_reduction <add>, %63, %cst_29 [1] : vector<8x8xf32> to vector<8xf32>
    %65 = vector.shape_cast %64 : vector<8xf32> to vector<8x1xf32>
    %cst_30 = arith.constant 1.000000e-30 : f32
    %66 = vector.broadcast %cst_30 : f32 to vector<8x1xf32>
    %67 = arith.maximumf %65, %66 : vector<8x1xf32>
    %68 = tpu.reciprocal %67 {approx = true} : vector<8x1xf32> -> vector<8x1xf32>
    %69 = vector.broadcast %68 : vector<8x1xf32> to vector<8x8xf32>
    %70 = arith.mulf %63, %69 : vector<8x8xf32>
    %71 = vector.extract_strided_slice %3 {offsets = [0, 8], sizes = [8, 8], strides = [1, 1]} : vector<8x16xf32> to vector<8x8xf32>
    %cst_31 = arith.constant dense<0.000000e+00> : vector<8x8xf32>
    %72 = tpu.matmul %70, %71, %cst_31 {dimension_numbers = #tpu.dot_dimension_numbers<[1], [0], [0], [1], [0, 0, 1, 1], [], []>} : vector<8x8xf32>, vector<8x8xf32>, vector<8x8xf32> -> vector<8x8xf32>
    %73 = tpu.concatenate %43, %72 in 1 : vector<8x8xf32>, vector<8x8xf32> -> vector<8x16xf32>
    %c0_32 = arith.constant 0 : index
    %c0_33 = arith.constant 0 : index
    %c0_34 = arith.constant 0 : index
    %74 = vector.load %arg4[%c0_32, %c0_33, %c0_34] : memref<2x1x16xf32, #tpu.memory_space<vmem>>, vector<1x1x16xf32>
    %75 = vector.shape_cast %74 : vector<1x1x16xf32> to vector<1x16xf32>
    %76 = vector.broadcast %75 : vector<1x16xf32> to vector<8x16xf32>
    %77 = arith.addf %73, %76 : vector<8x16xf32>
    %cst_35 = arith.constant 0.000000e+00 : f32
    %78 = vector.broadcast %cst_35 : f32 to vector<8x16xf32>
    %79 = arith.cmpf ogt, %77, %78 : vector<8x16xf32>
    %80 = math.exp %77 : vector<8x16xf32>
    %cst_36 = arith.constant 1.000000e+00 : f32
    %81 = vector.broadcast %cst_36 : f32 to vector<8x16xf32>
    %82 = arith.subf %80, %81 : vector<8x16xf32>
    %83 = arith.select %79, %77, %82 : vector<8x16xi1>, vector<8x16xf32>
    %c1 = arith.constant 1 : index
    %c0_37 = arith.constant 0 : index
    %c0_38 = arith.constant 0 : index
    %84 = vector.load %arg1[%c1, %c0_37, %c0_38] : memref<2x16x16xf32, #tpu.memory_space<vmem>>, vector<1x16x16xf32>
    %85 = vector.shape_cast %84 : vector<1x16x16xf32> to vector<16x16xf32>
    %cst_39 = arith.constant dense<0.000000e+00> : vector<8x16xf32>
    %86 = tpu.matmul %0, %85, %cst_39 {dimension_numbers = #tpu.dot_dimension_numbers<[1], [0], [0], [1], [0, 0, 1, 1], [], []>} : vector<8x16xf32>, vector<16x16xf32>, vector<8x16xf32> -> vector<8x16xf32>
    %c1_40 = arith.constant 1 : index
    %c0_41 = arith.constant 0 : index
    %c0_42 = arith.constant 0 : index
    %87 = vector.load %arg2[%c1_40, %c0_41, %c0_42] : memref<2x16x2xf32, #tpu.memory_space<vmem>>, vector<1x16x2xf32>
    %88 = vector.shape_cast %87 : vector<1x16x2xf32> to vector<16x2xf32>
    %cst_43 = arith.constant dense<0.000000e+00> : vector<8x2xf32>
    %89 = tpu.matmul %86, %88, %cst_43 {dimension_numbers = #tpu.dot_dimension_numbers<[1], [0], [0], [1], [0, 0, 1, 1], [], []>} : vector<8x16xf32>, vector<16x2xf32>, vector<8x2xf32> -> vector<8x2xf32>
    %c1_44 = arith.constant 1 : index
    %c0_45 = arith.constant 0 : index
    %c0_46 = arith.constant 0 : index
    %90 = vector.load %arg3[%c1_44, %c0_45, %c0_46] : memref<2x16x2xf32, #tpu.memory_space<vmem>>, vector<1x16x2xf32>
    %91 = vector.shape_cast %90 : vector<1x16x2xf32> to vector<16x2xf32>
    %cst_47 = arith.constant dense<0.000000e+00> : vector<8x2xf32>
    %92 = tpu.matmul %86, %91, %cst_47 {dimension_numbers = #tpu.dot_dimension_numbers<[1], [0], [0], [1], [0, 0, 1, 1], [], []>} : vector<8x16xf32>, vector<16x2xf32>, vector<8x2xf32> -> vector<8x2xf32>
    %93 = tpu.transpose %89, [1, 0] : vector<8x2xf32> -> vector<2x8xf32>
    %c1_48 = arith.constant 1 : index
    %c0_49 = arith.constant 0 : index
    %c0_50 = arith.constant 0 : index
    %94 = vector.load %arg5[%c1_48, %c0_49, %c0_50] : memref<2x8x8xf32, #tpu.memory_space<vmem>>, vector<1x8x8xf32>
    %95 = vector.shape_cast %94 : vector<1x8x8xf32> to vector<8x8xf32>
    %cst_51 = arith.constant 0.000000e+00 : f32
    %96 = vector.broadcast %cst_51 : f32 to vector<8x8xf32>
    %97 = arith.cmpf one, %95, %96 : vector<8x8xf32>
    %98 = vector.extract_strided_slice %92 {offsets = [0, 0], sizes = [8, 1], strides = [1, 1]} : vector<8x2xf32> to vector<8x1xf32>
    %99 = vector.extract_strided_slice %93 {offsets = [0, 0], sizes = [1, 8], strides = [1, 1]} : vector<2x8xf32> to vector<1x8xf32>
    %100 = vector.broadcast %98 : vector<8x1xf32> to vector<8x8xf32>
    %101 = vector.broadcast %99 : vector<1x8xf32> to vector<8x8xf32>
    %102 = arith.addf %100, %101 : vector<8x8xf32>
    %103 = arith.mulf %102, %95 : vector<8x8xf32>
    %cst_52 = arith.constant 0.000000e+00 : f32
    %104 = vector.broadcast %cst_52 : f32 to vector<8x8xf32>
    %105 = arith.cmpf oge, %103, %104 : vector<8x8xf32>
    %cst_53 = arith.constant 2.000000e-01 : f32
    %106 = vector.broadcast %cst_53 : f32 to vector<8x8xf32>
    %107 = arith.mulf %106, %103 : vector<8x8xf32>
    %108 = arith.select %105, %103, %107 : vector<8x8xi1>, vector<8x8xf32>
    %cst_54 = arith.constant -1.000000e+30 : f32
    %109 = vector.broadcast %cst_54 : f32 to vector<8x8xf32>
    %110 = arith.select %97, %108, %109 : vector<8x8xi1>, vector<8x8xf32>
    %cst_55 = arith.constant dense<0xFF800000> : vector<8xf32>
    %111 = vector.multi_reduction <maximumf>, %110, %cst_55 [1] : vector<8x8xf32> to vector<8xf32>
    %112 = vector.shape_cast %111 : vector<8xf32> to vector<8x1xf32>
    %113 = vector.broadcast %112 : vector<8x1xf32> to vector<8x8xf32>
    %114 = arith.subf %110, %113 : vector<8x8xf32>
    %115 = math.exp %114 : vector<8x8xf32>
    %cst_56 = arith.constant 0.000000e+00 : f32
    %116 = vector.broadcast %cst_56 : f32 to vector<8x8xf32>
    %117 = arith.select %97, %115, %116 : vector<8x8xi1>, vector<8x8xf32>
    %cst_57 = arith.constant dense<0.000000e+00> : vector<8xf32>
    %118 = vector.multi_reduction <add>, %117, %cst_57 [1] : vector<8x8xf32> to vector<8xf32>
    %119 = vector.shape_cast %118 : vector<8xf32> to vector<8x1xf32>
    %cst_58 = arith.constant 1.000000e-30 : f32
    %120 = vector.broadcast %cst_58 : f32 to vector<8x1xf32>
    %121 = arith.maximumf %119, %120 : vector<8x1xf32>
    %122 = tpu.reciprocal %121 {approx = true} : vector<8x1xf32> -> vector<8x1xf32>
    %123 = vector.broadcast %122 : vector<8x1xf32> to vector<8x8xf32>
    %124 = arith.mulf %117, %123 : vector<8x8xf32>
    %125 = vector.extract_strided_slice %86 {offsets = [0, 0], sizes = [8, 8], strides = [1, 1]} : vector<8x16xf32> to vector<8x8xf32>
    %cst_59 = arith.constant dense<0.000000e+00> : vector<8x8xf32>
    %126 = tpu.matmul %124, %125, %cst_59 {dimension_numbers = #tpu.dot_dimension_numbers<[1], [0], [0], [1], [0, 0, 1, 1], [], []>} : vector<8x8xf32>, vector<8x8xf32>, vector<8x8xf32> -> vector<8x8xf32>
    %127 = vector.extract_strided_slice %92 {offsets = [0, 1], sizes = [8, 1], strides = [1, 1]} : vector<8x2xf32> to vector<8x1xf32>
    %128 = vector.extract_strided_slice %93 {offsets = [1, 0], sizes = [1, 8], strides = [1, 1]} : vector<2x8xf32> to vector<1x8xf32>
    %129 = vector.broadcast %127 : vector<8x1xf32> to vector<8x8xf32>
    %130 = vector.broadcast %128 : vector<1x8xf32> to vector<8x8xf32>
    %131 = arith.addf %129, %130 : vector<8x8xf32>
    %132 = arith.mulf %131, %95 : vector<8x8xf32>
    %cst_60 = arith.constant 0.000000e+00 : f32
    %133 = vector.broadcast %cst_60 : f32 to vector<8x8xf32>
    %134 = arith.cmpf oge, %132, %133 : vector<8x8xf32>
    %cst_61 = arith.constant 2.000000e-01 : f32
    %135 = vector.broadcast %cst_61 : f32 to vector<8x8xf32>
    %136 = arith.mulf %135, %132 : vector<8x8xf32>
    %137 = arith.select %134, %132, %136 : vector<8x8xi1>, vector<8x8xf32>
    %cst_62 = arith.constant -1.000000e+30 : f32
    %138 = vector.broadcast %cst_62 : f32 to vector<8x8xf32>
    %139 = arith.select %97, %137, %138 : vector<8x8xi1>, vector<8x8xf32>
    %cst_63 = arith.constant dense<0xFF800000> : vector<8xf32>
    %140 = vector.multi_reduction <maximumf>, %139, %cst_63 [1] : vector<8x8xf32> to vector<8xf32>
    %141 = vector.shape_cast %140 : vector<8xf32> to vector<8x1xf32>
    %142 = vector.broadcast %141 : vector<8x1xf32> to vector<8x8xf32>
    %143 = arith.subf %139, %142 : vector<8x8xf32>
    %144 = math.exp %143 : vector<8x8xf32>
    %cst_64 = arith.constant 0.000000e+00 : f32
    %145 = vector.broadcast %cst_64 : f32 to vector<8x8xf32>
    %146 = arith.select %97, %144, %145 : vector<8x8xi1>, vector<8x8xf32>
    %cst_65 = arith.constant dense<0.000000e+00> : vector<8xf32>
    %147 = vector.multi_reduction <add>, %146, %cst_65 [1] : vector<8x8xf32> to vector<8xf32>
    %148 = vector.shape_cast %147 : vector<8xf32> to vector<8x1xf32>
    %cst_66 = arith.constant 1.000000e-30 : f32
    %149 = vector.broadcast %cst_66 : f32 to vector<8x1xf32>
    %150 = arith.maximumf %148, %149 : vector<8x1xf32>
    %151 = tpu.reciprocal %150 {approx = true} : vector<8x1xf32> -> vector<8x1xf32>
    %152 = vector.broadcast %151 : vector<8x1xf32> to vector<8x8xf32>
    %153 = arith.mulf %146, %152 : vector<8x8xf32>
    %154 = vector.extract_strided_slice %86 {offsets = [0, 8], sizes = [8, 8], strides = [1, 1]} : vector<8x16xf32> to vector<8x8xf32>
    %cst_67 = arith.constant dense<0.000000e+00> : vector<8x8xf32>
    %155 = tpu.matmul %153, %154, %cst_67 {dimension_numbers = #tpu.dot_dimension_numbers<[1], [0], [0], [1], [0, 0, 1, 1], [], []>} : vector<8x8xf32>, vector<8x8xf32>, vector<8x8xf32> -> vector<8x8xf32>
    %156 = tpu.concatenate %126, %155 in 1 : vector<8x8xf32>, vector<8x8xf32> -> vector<8x16xf32>
    %c1_68 = arith.constant 1 : index
    %c0_69 = arith.constant 0 : index
    %c0_70 = arith.constant 0 : index
    %157 = vector.load %arg4[%c1_68, %c0_69, %c0_70] : memref<2x1x16xf32, #tpu.memory_space<vmem>>, vector<1x1x16xf32>
    %158 = vector.shape_cast %157 : vector<1x1x16xf32> to vector<1x16xf32>
    %159 = vector.broadcast %158 : vector<1x16xf32> to vector<8x16xf32>
    %160 = arith.addf %156, %159 : vector<8x16xf32>
    %cst_71 = arith.constant 0.000000e+00 : f32
    %161 = vector.broadcast %cst_71 : f32 to vector<8x16xf32>
    %162 = arith.cmpf ogt, %160, %161 : vector<8x16xf32>
    %163 = math.exp %160 : vector<8x16xf32>
    %cst_72 = arith.constant 1.000000e+00 : f32
    %164 = vector.broadcast %cst_72 : f32 to vector<8x16xf32>
    %165 = arith.subf %163, %164 : vector<8x16xf32>
    %166 = arith.select %162, %160, %165 : vector<8x16xi1>, vector<8x16xf32>
    %167 = tpu.concatenate %83, %166 in 0 : vector<8x16xf32>, vector<8x16xf32> -> vector<16x16xf32>
    %c0_73 = arith.constant 0 : index
    %c0_74 = arith.constant 0 : index
    %168 = vector.load %arg6[%c0_73, %c0_74] : memref<16x128xf32, #tpu.memory_space<vmem>>, vector<16x128xf32>
    %cst_75 = arith.constant dense<0.000000e+00> : vector<16x128xf32>
    %169 = tpu.matmul %167, %168, %cst_75 {dimension_numbers = #tpu.dot_dimension_numbers<[1], [0], [0], [1], [0, 0, 1, 1], [], []>} : vector<16x16xf32>, vector<16x128xf32>, vector<16x128xf32> -> vector<16x128xf32>
    %c0_76 = arith.constant 0 : index
    %c0_77 = arith.constant 0 : index
    %170 = vector.load %arg7[%c0_76, %c0_77] : memref<1x128xf32, #tpu.memory_space<vmem>>, vector<1x128xf32>
    %171 = vector.broadcast %170 : vector<1x128xf32> to vector<16x128xf32>
    %172 = arith.addf %169, %171 : vector<16x128xf32>
    %173 = math.tanh %172 : vector<16x128xf32>
    %c0_78 = arith.constant 0 : index
    %c0_79 = arith.constant 0 : index
    %174 = vector.load %arg8[%c0_78, %c0_79] : memref<128x1xf32, #tpu.memory_space<vmem>>, vector<128x1xf32>
    %cst_80 = arith.constant dense<0.000000e+00> : vector<16x1xf32>
    %175 = tpu.matmul %173, %174, %cst_80 {dimension_numbers = #tpu.dot_dimension_numbers<[1], [0], [0], [1], [0, 0, 1, 1], [], []>} : vector<16x128xf32>, vector<128x1xf32>, vector<16x1xf32> -> vector<16x1xf32>
    %176 = vector.extract_strided_slice %175 {offsets = [0, 0], sizes = [8, 1], strides = [1, 1]} : vector<16x1xf32> to vector<8x1xf32>
    %177 = vector.shape_cast %176 : vector<8x1xf32> to vector<1x8x1xf32>
    %cst_81 = arith.constant dense<0.000000e+00> : vector<1xf32>
    %178 = vector.multi_reduction <add>, %177, %cst_81 [1, 2] : vector<1x8x1xf32> to vector<1xf32>
    %179 = vector.shape_cast %178 : vector<1xf32> to vector<1x1x1xf32>
    %180 = vector.extract %179[0, 0, 0] : f32 from vector<1x1x1xf32>
    %181 = vector.broadcast %180 : f32 to vector<1x1xf32>
    %cst_82 = arith.constant 8.000000e+00 : f32
    %182 = vector.broadcast %cst_82 : f32 to vector<1x1xf32>
    %183 = arith.divf %181, %182 : vector<1x1xf32>
    %184 = vector.extract_strided_slice %175 {offsets = [8, 0], sizes = [8, 1], strides = [1, 1]} : vector<16x1xf32> to vector<8x1xf32>
    %185 = vector.shape_cast %184 : vector<8x1xf32> to vector<1x8x1xf32>
    %cst_83 = arith.constant dense<0.000000e+00> : vector<1xf32>
    %186 = vector.multi_reduction <add>, %185, %cst_83 [1, 2] : vector<1x8x1xf32> to vector<1xf32>
    %187 = vector.shape_cast %186 : vector<1xf32> to vector<1x1x1xf32>
    %188 = vector.extract %187[0, 0, 0] : f32 from vector<1x1x1xf32>
    %189 = vector.broadcast %188 : f32 to vector<1x1xf32>
    %cst_84 = arith.constant 8.000000e+00 : f32
    %190 = vector.broadcast %cst_84 : f32 to vector<1x1xf32>
    %191 = arith.divf %189, %190 : vector<1x1xf32>
    %192 = arith.maximumf %183, %191 : vector<1x1xf32>
    %193 = arith.subf %183, %192 : vector<1x1xf32>
    %194 = math.exp %193 : vector<1x1xf32>
    %195 = arith.subf %191, %192 : vector<1x1xf32>
    %196 = math.exp %195 : vector<1x1xf32>
    %197 = arith.addf %194, %196 : vector<1x1xf32>
    %198 = arith.divf %194, %197 : vector<1x1xf32>
    %199 = vector.broadcast %198 : vector<1x1xf32> to vector<8x16xf32>
    %200 = arith.mulf %199, %83 : vector<8x16xf32>
    %201 = arith.divf %196, %197 : vector<1x1xf32>
    %202 = vector.broadcast %201 : vector<1x1xf32> to vector<8x16xf32>
    %203 = arith.mulf %202, %166 : vector<8x16xf32>
    %204 = arith.addf %200, %203 : vector<8x16xf32>
    %c0_85 = arith.constant 0 : index
    %c0_86 = arith.constant 0 : index
    %205 = vector.load %arg9[%c0_85, %c0_86] : memref<8x16xf32, #tpu.memory_space<vmem>>, vector<8x16xf32>
    tpu.vector_store %arg9[%c0_85, %c0_86], %204 {strides = array<i32>} : memref<8x16xf32, #tpu.memory_space<vmem>>, vector<8x16xf32>,
    return
  }
}

</mosaic_0001>

<llo_original>
// kernel: tpu_custom_call.1
$region0: #{tpu_custom_call.1}
  #allocation0 [shape = 'u32[]', space=smem, size = 0x4, offset = 0x4, fixed_abs, tag = 'smem constant byte address 0x4 - core index']
  #allocation1 [shape = 'u32[144,128]{1,0:T(1,128)}', space=vmem, size = 0x12000, scoped, tag = 'internal scratch']
  %s0 = inlined_call_operand.vmem [shape: f32[8,16], index: 0, kind: input, shape index: {}]
  %s1 = inlined_call_operand.vmem [shape: f32[2,16,16], index: 1, kind: input, shape index: {}]
  %s2 = inlined_call_operand.vmem [shape: f32[2,16,2], index: 2, kind: input, shape index: {}]
  %s3 = inlined_call_operand.vmem [shape: f32[2,16,2], index: 3, kind: input, shape index: {}]
  %s4 = inlined_call_operand.vmem [shape: f32[2,1,16], index: 4, kind: input, shape index: {}]
  %s5 = inlined_call_operand.vmem [shape: f32[2,8,8], index: 5, kind: input, shape index: {}]
  %s6 = inlined_call_operand.vmem [shape: f32[16,128], index: 6, kind: input, shape index: {}]
  %s7 = inlined_call_operand.vmem [shape: f32[1,128], index: 7, kind: input, shape index: {}]
  %s8 = inlined_call_operand.vmem [shape: f32[128,1], index: 8, kind: input, shape index: {}]
  %s9 = inlined_call_operand.hbm [shape: f32[8,16], index: 9, kind: output, shape index: {}]
  %s10 = sld [smem:[#allocation0]]
  $region46: #{tpu_custom_call.1} parent=0
    _
  %s12 = ssub.s32 1, %s10
  %s13 = scalar_select 0, %s12, %s10
  $region1: #{tpu_custom_call.1} parent=0
    #allocation2 [shape = 'u8[4096]{0}', space=vmem, size = 0x1000, scoped, tag = 'output window, operand 0, single buffered']
    #allocation3 [shape = 's32[1]{0}', space=sflag, size = 0x4, scoped, tag = 'scoped memory for tpu_custom_call.1']
    %14 = vsyncpa [#allocation3], 0
    // Predicated region
    $region2: #{tpu_custom_call.1} parent=1 // pred_check
      _
    $region3: #{tpu_custom_call.1} parent=1 // pred_check_branch
      %16 = sbr.rel (0) target = $region5
    $region4: #{tpu_custom_call.1} parent=1 // pred_region
      _
    $region5: #{tpu_custom_call.1} parent=1 // pred_fallthru
      _
    // Predicated region
    $region6: #{tpu_custom_call.1} parent=1 // pred_check
      _
    $region7: #{tpu_custom_call.1} parent=1 // pred_check_branch
      %18 = sbr.rel (0) target = $region9
    $region8: #{tpu_custom_call.1} parent=1 // pred_region
      _
    $region9: #{tpu_custom_call.1} parent=1 // pred_fallthru
      _
    // Predicated region
    $region10: #{tpu_custom_call.1} parent=1 // pred_check
      _
    $region11: #{tpu_custom_call.1} parent=1 // pred_check_branch
      %20 = sbr.rel (0) target = $region13
    $region12: #{tpu_custom_call.1} parent=1 // pred_region
      _
    $region13: #{tpu_custom_call.1} parent=1 // pred_fallthru
      _
    // Predicated region
    $region14: #{tpu_custom_call.1} parent=1 // pred_check
      _
    $region15: #{tpu_custom_call.1} parent=1 // pred_check_branch
      %22 = sbr.rel (0) target = $region17
    $region16: #{tpu_custom_call.1} parent=1 // pred_region
      _
    $region17: #{tpu_custom_call.1} parent=1 // pred_fallthru
      _
    // Predicated region
    $region18: #{tpu_custom_call.1} parent=1 // pred_check
      _
    $region19: #{tpu_custom_call.1} parent=1 // pred_check_branch
      %24 = sbr.rel (0) target = $region21
    $region20: #{tpu_custom_call.1} parent=1 // pred_region
      _
    $region21: #{tpu_custom_call.1} parent=1 // pred_fallthru
      _
    // Predicated region
    $region22: #{tpu_custom_call.1} parent=1 // pred_check
      _
    $region23: #{tpu_custom_call.1} parent=1 // pred_check_branch
      %26 = sbr.rel (0) target = $region25
    $region24: #{tpu_custom_call.1} parent=1 // pred_region
      _
    $region25: #{tpu_custom_call.1} parent=1 // pred_fallthru
      _
    // Predicated region
    $region26: #{tpu_custom_call.1} parent=1 // pred_check
      _
    $region27: #{tpu_custom_call.1} parent=1 // pred_check_branch
      %28 = sbr.rel (0) target = $region29
    $region28: #{tpu_custom_call.1} parent=1 // pred_region
      _
    $region29: #{tpu_custom_call.1} parent=1 // pred_fallthru
      _
    // Predicated region
    $region30: #{tpu_custom_call.1} parent=1 // pred_check
      _
    $region31: #{tpu_custom_call.1} parent=1 // pred_check_branch
      %30 = sbr.rel (0) target = $region33
    $region32: #{tpu_custom_call.1} parent=1 // pred_region
      _
    $region33: #{tpu_custom_call.1} parent=1 // pred_fallthru
      _
    // Predicated region
    $region34: #{tpu_custom_call.1} parent=1 // pred_check
      _
    $region35: #{tpu_custom_call.1} parent=1 // pred_check_branch
      %32 = sbr.rel (0) target = $region37
    $region36: #{tpu_custom_call.1} parent=1 // pred_region
      _
    $region37: #{tpu_custom_call.1} parent=1 // pred_fallthru
      _
    %v33 = vld [vmem:[%s0] sm:$0xff]
    %v34 = vld [vmem:[%s1] sm:$0xff]
    %v35 = vld [vmem:[%s1 + $0x8] sm:$0xff]
    %vm36 = vcmask 130048
    %v38 = vsel %vm36, %v33, 0
    %40 = vmatprep.subr.mxu0 0.0
    %41 = vmatpush1.msra.mxu0 0.0
    %42 = vmatprep.subr.mxu0 0.0
    %43 = vmatpush1.msra.mxu0 0.0
    %44 = vmatprep.subr.mxu0 0.0
    %45 = vmatpush1.msra.mxu0 0.0
    %46 = vmatprep.subr.mxu0 0.0
    %47 = vmatpush1.msra.mxu0 0.0
    %48 = vmatprep.subr.mxu0 0.0
    %49 = vmatpush1.msra.mxu0 0.0
    %50 = vmatprep.subr.mxu0 0.0
    %51 = vmatpush1.msra.mxu0 0.0
    %52 = vmatprep.subr.mxu0 0.0
    %53 = vmatpush1.msra.mxu0 0.0
    %54 = vmatprep.subr.mxu0 0.0
    %55 = vmatpush1.msra.mxu0 0.0
    %56 = vmatprep.subr.mxu0 0.0
    %57 = vmatpush1.msra.mxu0 0.0
    %58 = vmatprep.subr.mxu0 0.0
    %59 = vmatpush1.msra.mxu0 0.0
    %60 = vmatprep.subr.mxu0 0.0
    %61 = vmatpush1.msra.mxu0 0.0
    %62 = vmatprep.subr.mxu0 0.0
    %63 = vmatpush1.msra.mxu0 0.0
    %64 = vmatprep.subr.mxu0 0.0
    %65 = vmatpush1.msra.mxu0 0.0
    %66 = vmatprep.subr.mxu0 0.0
    %67 = vmatpush1.msra.mxu0 0.0
    %68 = vmatprep.subr.mxu0 0.0
    %69 = vmatpush1.msra.mxu0 %v35
    %70 = vmatprep.subr.mxu0 0.0
    %71 = vmatpush1.msra.mxu0 %v34
    %72 = vmatprep.subr.mxu0 0.0
    %73 = vmatpush2.msra.mxu0 0.0
    %74 = vmatprep.subr.mxu0 0.0
    %75 = vmatpush2.msra.mxu0 0.0
    %76 = vmatprep.subr.mxu0 0.0
    %77 = vmatpush2.msra.mxu0 0.0
    %78 = vmatprep.subr.mxu0 0.0
    %79 = vmatpush2.msra.mxu0 0.0
    %80 = vmatprep.subr.mxu0 0.0
    %81 = vmatpush2.msra.mxu0 0.0
    %82 = vmatprep.subr.mxu0 0.0
    %83 = vmatpush2.msra.mxu0 0.0
    %84 = vmatprep.subr.mxu0 0.0
    %85 = vmatpush2.msra.mxu0 0.0
    %86 = vmatprep.subr.mxu0 0.0
    %87 = vmatpush2.msra.mxu0 0.0
    %88 = vmatprep.subr.mxu0 0.0
    %89 = vmatpush2.msra.mxu0 0.0
    %90 = vmatprep.subr.mxu0 0.0
    %91 = vmatpush2.msra.mxu0 0.0
    %92 = vmatprep.subr.mxu0 0.0
    %93 = vmatpush2.msra.mxu0 0.0
    %94 = vmatprep.subr.mxu0 0.0
    %95 = vmatpush2.msra.mxu0 0.0
    %96 = vmatprep.subr.mxu0 0.0
    %97 = vmatpush2.msra.mxu0 0.0
    %98 = vmatprep.subr.mxu0 0.0
    %99 = vmatpush2.msra.mxu0 0.0
    %100 = vmatprep.subr.mxu0 0.0
    %101 = vmatpush2.msra.mxu0 0.0
    %102 = vmatprep.subr.mxu0 0.0
    %103 = vmatpush2.msra.mxu0 0.0
    %104 = vmatprep.mubr.f32.mxu0 0.0
    %105 = vmatmul.mubr.f32.gmra.mxu0 %v38
    %v106 = vpop.f32.mrf.mxu0
    %v107 = vadd.f32 0.0, %v106
    %v108 = vpop.f32.mrf.mxu0
    %109 = vdwg.mxu0
    %v110 = vld [vmem:[%s2] sm:$0xff]
    %v111 = vld [vmem:[%s2 + $0x8] sm:$0xff]
    %v113 = vsel %vm36, %v107, 0
    %115 = vmatprep.subr.mxu0 0.0
    %116 = vmatpush1.msra.mxu0 0.0
    %117 = vmatprep.subr.mxu0 0.0
    %118 = vmatpush1.msra.mxu0 0.0
    %119 = vmatprep.subr.mxu0 0.0
    %120 = vmatpush1.msra.mxu0 0.0
    %121 = vmatprep.subr.mxu0 0.0
    %122 = vmatpush1.msra.mxu0 0.0
    %123 = vmatprep.subr.mxu0 0.0
    %124 = vmatpush1.msra.mxu0 0.0
    %125 = vmatprep.subr.mxu0 0.0
    %126 = vmatpush1.msra.mxu0 0.0
    %127 = vmatprep.subr.mxu0 0.0
    %128 = vmatpush1.msra.mxu0 0.0
    %129 = vmatprep.subr.mxu0 0.0
    %130 = vmatpush1.msra.mxu0 0.0
    %131 = vmatprep.subr.mxu0 0.0
    %132 = vmatpush1.msra.mxu0 0.0
    %133 = vmatprep.subr.mxu0 0.0
    %134 = vmatpush1.msra.mxu0 0.0
    %135 = vmatprep.subr.mxu0 0.0
    %136 = vmatpush1.msra.mxu0 0.0
    %137 = vmatprep.subr.mxu0 0.0
    %138 = vmatpush1.msra.mxu0 0.0
    %139 = vmatprep.subr.mxu0 0.0
    %140 = vmatpush1.msra.mxu0 0.0
    %141 = vmatprep.subr.mxu0 0.0
    %142 = vmatpush1.msra.mxu0 0.0
    %143 = vmatprep.subr.mxu0 0.0
    %144 = vmatpush1.msra.mxu0 %v111
    %145 = vmatprep.subr.mxu0 0.0
    %146 = vmatpush1.msra.mxu0 %v110
    %147 = vmatprep.subr.mxu0 0.0
    %148 = vmatpush2.msra.mxu0 0.0
    %149 = vmatprep.subr.mxu0 0.0
    %150 = vmatpush2.msra.mxu0 0.0
    %151 = vmatprep.subr.mxu0 0.0
    %152 = vmatpush2.msra.mxu0 0.0
    %153 = vmatprep.subr.mxu0 0.0
    %154 = vmatpush2.msra.mxu0 0.0
    %155 = vmatprep.subr.mxu0 0.0
    %156 = vmatpush2.msra.mxu0 0.0
    %157 = vmatprep.subr.mxu0 0.0
    %158 = vmatpush2.msra.mxu0 0.0
    %159 = vmatprep.subr.mxu0 0.0
    %160 = vmatpush2.msra.mxu0 0.0
    %161 = vmatprep.subr.mxu0 0.0
    %162 = vmatpush2.msra.mxu0 0.0
    %163 = vmatprep.subr.mxu0 0.0
    %164 = vmatpush2.msra.mxu0 0.0
    %165 = vmatprep.subr.mxu0 0.0
    %166 = vmatpush2.msra.mxu0 0.0
    %167 = vmatprep.subr.mxu0 0.0
    %168 = vmatpush2.msra.mxu0 0.0
    %169 = vmatprep.subr.mxu0 0.0
    %170 = vmatpush2.msra.mxu0 0.0
    %171 = vmatprep.subr.mxu0 0.0
    %172 = vmatpush2.msra.mxu0 0.0
    %173 = vmatprep.subr.mxu0 0.0
    %174 = vmatpush2.msra.mxu0 0.0
    %175 = vmatprep.subr.mxu0 0.0
    %176 = vmatpush2.msra.mxu0 0.0
    %177 = vmatprep.subr.mxu0 0.0
    %178 = vmatpush2.msra.mxu0 0.0
    %179 = vmatprep.mubr.f32.mxu0 0.0
    %180 = vmatmul.mubr.f32.gmra.mxu0 %v113
    %v181 = vpop.f32.mrf.mxu0
    %v182 = vadd.f32 0.0, %v181
    %v183 = vpop.f32.mrf.mxu0
    %184 = vdwg.mxu0
    %v185 = vld [vmem:[%s3] sm:$0xff]
    %v186 = vld [vmem:[%s3 + $0x8] sm:$0xff]
    %187 = vmatprep.subr.mxu0 0.0
    %188 = vmatpush1.msra.mxu0 0.0
    %189 = vmatprep.subr.mxu0 0.0
    %190 = vmatpush1.msra.mxu0 0.0
    %191 = vmatprep.subr.mxu0 0.0
    %192 = vmatpush1.msra.mxu0 0.0
    %193 = vmatprep.subr.mxu0 0.0
    %194 = vmatpush1.msra.mxu0 0.0
    %195 = vmatprep.subr.mxu0 0.0
    %196 = vmatpush1.msra.mxu0 0.0
    %197 = vmatprep.subr.mxu0 0.0
    %198 = vmatpush1.msra.mxu0 0.0
    %199 = vmatprep.subr.mxu0 0.0
    %200 = vmatpush1.msra.mxu0 0.0
    %201 = vmatprep.subr.mxu0 0.0
    %202 = vmatpush1.msra.mxu0 0.0
    %203 = vmatprep.subr.mxu0 0.0
    %204 = vmatpush1.msra.mxu0 0.0
    %205 = vmatprep.subr.mxu0 0.0
    %206 = vmatpush1.msra.mxu0 0.0
    %207 = vmatprep.subr.mxu0 0.0
    %208 = vmatpush1.msra.mxu0 0.0
    %209 = vmatprep.subr.mxu0 0.0
    %210 = vmatpush1.msra.mxu0 0.0
    %211 = vmatprep.subr.mxu0 0.0
    %212 = vmatpush1.msra.mxu0 0.0
    %213 = vmatprep.subr.mxu0 0.0
    %214 = vmatpush1.msra.mxu0 0.0
    %215 = vmatprep.subr.mxu0 0.0
    %216 = vmatpush1.msra.mxu0 %v186
    %217 = vmatprep.subr.mxu0 0.0
    %218 = vmatpush1.msra.mxu0 %v185
    %219 = vmatprep.subr.mxu0 0.0
    %220 = vmatpush2.msra.mxu0 0.0
    %221 = vmatprep.subr.mxu0 0.0
    %222 = vmatpush2.msra.mxu0 0.0
    %223 = vmatprep.subr.mxu0 0.0
    %224 = vmatpush2.msra.mxu0 0.0
    %225 = vmatprep.subr.mxu0 0.0
    %226 = vmatpush2.msra.mxu0 0.0
    %227 = vmatprep.subr.mxu0 0.0
    %228 = vmatpush2.msra.mxu0 0.0
    %229 = vmatprep.subr.mxu0 0.0
    %230 = vmatpush2.msra.mxu0 0.0
    %231 = vmatprep.subr.mxu0 0.0
    %232 = vmatpush2.msra.mxu0 0.0
    %233 = vmatprep.subr.mxu0 0.0
    %234 = vmatpush2.msra.mxu0 0.0
    %235 = vmatprep.subr.mxu0 0.0
    %236 = vmatpush2.msra.mxu0 0.0
    %237 = vmatprep.subr.mxu0 0.0
    %238 = vmatpush2.msra.mxu0 0.0
    %239 = vmatprep.subr.mxu0 0.0
    %240 = vmatpush2.msra.mxu0 0.0
    %241 = vmatprep.subr.mxu0 0.0
    %242 = vmatpush2.msra.mxu0 0.0
    %243 = vmatprep.subr.mxu0 0.0
    %244 = vmatpush2.msra.mxu0 0.0
    %245 = vmatprep.subr.mxu0 0.0
    %246 = vmatpush2.msra.mxu0 0.0
    %247 = vmatprep.subr.mxu0 0.0
    %248 = vmatpush2.msra.mxu0 0.0
    %249 = vmatprep.subr.mxu0 0.0
    %250 = vmatpush2.msra.mxu0 0.0
    %251 = vmatprep.mubr.f32.mxu0 0.0
    %252 = vmatmul.mubr.f32.gmra.mxu0 %v113
    %v253 = vpop.f32.mrf.mxu0
    %v254 = vadd.f32 0.0, %v253
    %v255 = vpop.f32.mrf.mxu0
    %256 = vdwg.mxu0
    %257 = vxpose.xlu0.b32.start [1/16] %v182, 128
    %258 = vxpose.xlu0.b32.cont [2/16] 0.0, 128
    %259 = vxpose.xlu0.b32.cont [3/16] 0.0, 128
    %260 = vxpose.xlu0.b32.cont [4/16] 0.0, 128
    %261 = vxpose.xlu0.b32.cont [5/16] 0.0, 128
    %262 = vxpose.xlu0.b32.cont [6/16] 0.0, 128
    %263 = vxpose.xlu0.b32.cont [7/16] 0.0, 128
    %264 = vxpose.xlu0.b32.cont [8/16] 0.0, 128
    %265 = vxpose.xlu0.b32.cont [9/16] 0.0, 128
    %266 = vxpose.xlu0.b32.cont [10/16] 0.0, 128
    %267 = vxpose.xlu0.b32.cont [11/16] 0.0, 128
    %268 = vxpose.xlu0.b32.cont [12/16] 0.0, 128
    %269 = vxpose.xlu0.b32.cont [13/16] 0.0, 128
    %270 = vxpose.xlu0.b32.cont [14/16] 0.0, 128
    %271 = vxpose.xlu0.b32.cont [15/16] 0.0, 128
    %272 = vxpose.xlu0.b32.end [16/16] 0.0, 128
    %v273 = vpop.trf.xlu0
    %v274 = vpop.trf.xlu0
    %v275 = vpop.trf.xlu0
    %v276 = vpop.trf.xlu0
    %v277 = vpop.trf.xlu0
    %v278 = vpop.trf.xlu0
    %v279 = vpop.trf.xlu0
    %v280 = vpop.trf.xlu0
    %v281 = vpop.trf.xlu0
    %v282 = vpop.trf.xlu0
    %v283 = vpop.trf.xlu0
    %v284 = vpop.trf.xlu0
    %v285 = vpop.trf.xlu0
    %v286 = vpop.trf.xlu0
    %v287 = vpop.trf.xlu0
    %v288 = vpop.trf.xlu0
    %v289 = vld [vmem:[%s5] sm:$0xff]
    %vm290 = vcmp.ne.f32.partialorder %v289, 0.0
    %292 = vset.pattern.permute.xlu0 0
    %293 = vperm.xlu0 %292, %v254
    %v294 = vpop.permute.xlu0 %293
    %v296 = vlaneseq
    %v297 = vshrl.u32 %v296, 7
    %v298 = vsub.s32 0, %v297
    %v299 = vrot.slane %v273, %v298
    %v300 = vadd.f32 %v294, %v299
    %v301 = vmul.f32 %v300, %v289
    %vm302 = vcmp.ge.f32.partialorder %v301, 0.0
    %v303 = vmul.f32 %v301, 0.2
    %v304 = vsel %vm302, %v301, %v303
    %v305 = vsel %vm290, %v304, -1e+30
    %vm306 = vcmask 64512
    %v307 = vsel %vm306, %v305, -inf
    %308 = vmax.xlane.f32.xlu0 %v307
    %v309 = vpop.xlane.xlu0 %308
    %v310 = vsub.f32 %v305, %v309
    %v311 = vmul.f32 %v310, 1.442695
    %v312 = vpow.pop %v311
    %v313 = vsel %vm290, %v312, 0.0
    %v314 = vsel %vm306, %v313, 0.0
    %315 = vadd.xlane.f32.xlu0 %v314
    %v316 = vpop.xlane.xlu0 %315
    %v317 = vmax.f32 %v316, 1e-30
    %v318 = vrcp.pop %v317
    %v319 = vmul.f32 %v313, %v318
    %v321 = vsel %vm306, %v319, 0
    %323 = vmatprep.subr.mxu0 0.0
    %324 = vmatpush1.msra.mxu0 0.0
    %325 = vmatprep.subr.mxu0 0.0
    %326 = vmatpush1.msra.mxu0 0.0
    %327 = vmatprep.subr.mxu0 0.0
    %328 = vmatpush1.msra.mxu0 0.0
    %329 = vmatprep.subr.mxu0 0.0
    %330 = vmatpush1.msra.mxu0 0.0
    %331 = vmatprep.subr.mxu0 0.0
    %332 = vmatpush1.msra.mxu0 0.0
    %333 = vmatprep.subr.mxu0 0.0
    %334 = vmatpush1.msra.mxu0 0.0
    %335 = vmatprep.subr.mxu0 0.0
    %336 = vmatpush1.msra.mxu0 0.0
    %337 = vmatprep.subr.mxu0 0.0
    %338 = vmatpush1.msra.mxu0 0.0
    %339 = vmatprep.subr.mxu0 0.0
    %340 = vmatpush1.msra.mxu0 0.0
    %341 = vmatprep.subr.mxu0 0.0
    %342 = vmatpush1.msra.mxu0 0.0
    %343 = vmatprep.subr.mxu0 0.0
    %344 = vmatpush1.msra.mxu0 0.0
    %345 = vmatprep.subr.mxu0 0.0
    %346 = vmatpush1.msra.mxu0 0.0
    %347 = vmatprep.subr.mxu0 0.0
    %348 = vmatpush1.msra.mxu0 0.0
    %349 = vmatprep.subr.mxu0 0.0
    %350 = vmatpush1.msra.mxu0 0.0
    %351 = vmatprep.subr.mxu0 0.0
    %352 = vmatpush1.msra.mxu0 0.0
    %353 = vmatprep.subr.mxu0 0.0
    %354 = vmatpush1.msra.mxu0 %v107
    %355 = vmatprep.subr.mxu0 0.0
    %356 = vmatpush2.msra.mxu0 0.0
    %357 = vmatprep.subr.mxu0 0.0
    %358 = vmatpush2.msra.mxu0 0.0
    %359 = vmatprep.subr.mxu0 0.0
    %360 = vmatpush2.msra.mxu0 0.0
    %361 = vmatprep.subr.mxu0 0.0
    %362 = vmatpush2.msra.mxu0 0.0
    %363 = vmatprep.subr.mxu0 0.0
    %364 = vmatpush2.msra.mxu0 0.0
    %365 = vmatprep.subr.mxu0 0.0
    %366 = vmatpush2.msra.mxu0 0.0
    %367 = vmatprep.subr.mxu0 0.0
    %368 = vmatpush2.msra.mxu0 0.0
    %369 = vmatprep.subr.mxu0 0.0
    %370 = vmatpush2.msra.mxu0 0.0
    %371 = vmatprep.subr.mxu0 0.0
    %372 = vmatpush2.msra.mxu0 0.0
    %373 = vmatprep.subr.mxu0 0.0
    %374 = vmatpush2.msra.mxu0 0.0
    %375 = vmatprep.subr.mxu0 0.0
    %376 = vmatpush2.msra.mxu0 0.0
    %377 = vmatprep.subr.mxu0 0.0
    %378 = vmatpush2.msra.mxu0 0.0
    %379 = vmatprep.subr.mxu0 0.0
    %380 = vmatpush2.msra.mxu0 0.0
    %381 = vmatprep.subr.mxu0 0.0
    %382 = vmatpush2.msra.mxu0 0.0
    %383 = vmatprep.subr.mxu0 0.0
    %384 = vmatpush2.msra.mxu0 0.0
    %385 = vmatprep.subr.mxu0 0.0
    %386 = vmatpush2.msra.mxu0 0.0
    %387 = vmatprep.mubr.f32.mxu0 0.0
    %388 = vmatmul.mubr.f32.gmra.mxu0 %v321
    %v389 = vpop.f32.mrf.mxu0
    %v390 = vadd.f32 0.0, %v389
    %v391 = vpop.f32.mrf.mxu0
    %392 = vdwg.mxu0
    %393 = vset.pattern.permute.xlu0 1
    %394 = vperm.xlu0 %393, %v254
    %v395 = vpop.permute.xlu0 %394
    %v397 = vlaneseq
    %v398 = vshrl.u32 %v397, 7
    %v399 = vsub.s32 1, %v398
    %v400 = vrot.slane %v273, %v399
    %v401 = vadd.f32 %v395, %v400
    %v402 = vmul.f32 %v401, %v289
    %vm403 = vcmp.ge.f32.partialorder %v402, 0.0
    %v404 = vmul.f32 %v402, 0.2
    %v405 = vsel %vm403, %v402, %v404
    %v406 = vsel %vm290, %v405, -1e+30
    %v407 = vsel %vm306, %v406, -inf
    %408 = vmax.xlane.f32.xlu0 %v407
    %v409 = vpop.xlane.xlu0 %408
    %v410 = vsub.f32 %v406, %v409
    %v411 = vmul.f32 %v410, 1.442695
    %v412 = vpow.pop %v411
    %v413 = vsel %vm290, %v412, 0.0
    %v414 = vsel %vm306, %v413, 0.0
    %415 = vadd.xlane.f32.xlu0 %v414
    %v416 = vpop.xlane.xlu0 %415
    %v417 = vmax.f32 %v416, 1e-30
    %v418 = vrcp.pop %v417
    %v419 = vmul.f32 %v413, %v418
    %420 = vrot.lane.b32.xlu0 %v107, 120
    %v421 = vpop.permute.xlu0 %420
    %v424 = vsel %vm306, %v419, 0
    %426 = vmatprep.subr.mxu0 0.0
    %427 = vmatpush1.msra.mxu0 0.0
    %428 = vmatprep.subr.mxu0 0.0
    %429 = vmatpush1.msra.mxu0 0.0
    %430 = vmatprep.subr.mxu0 0.0
    %431 = vmatpush1.msra.mxu0 0.0
    %432 = vmatprep.subr.mxu0 0.0
    %433 = vmatpush1.msra.mxu0 0.0
    %434 = vmatprep.subr.mxu0 0.0
    %435 = vmatpush1.msra.mxu0 0.0
    %436 = vmatprep.subr.mxu0 0.0
    %437 = vmatpush1.msra.mxu0 0.0
    %438 = vmatprep.subr.mxu0 0.0
    %439 = vmatpush1.msra.mxu0 0.0
    %440 = vmatprep.subr.mxu0 0.0
    %441 = vmatpush1.msra.mxu0 0.0
    %442 = vmatprep.subr.mxu0 0.0
    %443 = vmatpush1.msra.mxu0 0.0
    %444 = vmatprep.subr.mxu0 0.0
    %445 = vmatpush1.msra.mxu0 0.0
    %446 = vmatprep.subr.mxu0 0.0
    %447 = vmatpush1.msra.mxu0 0.0
    %448 = vmatprep.subr.mxu0 0.0
    %449 = vmatpush1.msra.mxu0 0.0
    %450 = vmatprep.subr.mxu0 0.0
    %451 = vmatpush1.msra.mxu0 0.0
    %452 = vmatprep.subr.mxu0 0.0
    %453 = vmatpush1.msra.mxu0 0.0
    %454 = vmatprep.subr.mxu0 0.0
    %455 = vmatpush1.msra.mxu0 0.0
    %456 = vmatprep.subr.mxu0 0.0
    %457 = vmatpush1.msra.mxu0 %v421
    %458 = vmatprep.subr.mxu0 0.0
    %459 = vmatpush2.msra.mxu0 0.0
    %460 = vmatprep.subr.mxu0 0.0
    %461 = vmatpush2.msra.mxu0 0.0
    %462 = vmatprep.subr.mxu0 0.0
    %463 = vmatpush2.msra.mxu0 0.0
    %464 = vmatprep.subr.mxu0 0.0
    %465 = vmatpush2.msra.mxu0 0.0
    %466 = vmatprep.subr.mxu0 0.0
    %467 = vmatpush2.msra.mxu0 0.0
    %468 = vmatprep.subr.mxu0 0.0
    %469 = vmatpush2.msra.mxu0 0.0
    %470 = vmatprep.subr.mxu0 0.0
    %471 = vmatpush2.msra.mxu0 0.0
    %472 = vmatprep.subr.mxu0 0.0
    %473 = vmatpush2.msra.mxu0 0.0
    %474 = vmatprep.subr.mxu0 0.0
    %475 = vmatpush2.msra.mxu0 0.0
    %476 = vmatprep.subr.mxu0 0.0
    %477 = vmatpush2.msra.mxu0 0.0
    %478 = vmatprep.subr.mxu0 0.0
    %479 = vmatpush2.msra.mxu0 0.0
    %480 = vmatprep.subr.mxu0 0.0
    %481 = vmatpush2.msra.mxu0 0.0
    %482 = vmatprep.subr.mxu0 0.0
    %483 = vmatpush2.msra.mxu0 0.0
    %484 = vmatprep.subr.mxu0 0.0
    %485 = vmatpush2.msra.mxu0 0.0
    %486 = vmatprep.subr.mxu0 0.0
    %487 = vmatpush2.msra.mxu0 0.0
    %488 = vmatprep.subr.mxu0 0.0
    %489 = vmatpush2.msra.mxu0 0.0
    %490 = vmatprep.mubr.f32.mxu0 0.0
    %491 = vmatmul.mubr.f32.gmra.mxu0 %v424
    %v492 = vpop.f32.mrf.mxu0
    %v493 = vadd.f32 0.0, %v492
    %v494 = vpop.f32.mrf.mxu0
    %495 = vdwg.mxu0
    %497 = vrot.lane.b32.xlu0 %v493, 8
    %v498 = vpop.permute.xlu0 %497
    %v500 = vsel %vm306, %v390, %v498
    %v501 = vld [vmem:[%s4] sm:$0x1]
    %v503 = vlaneseq
    %v504 = vshrl.u32 %v503, 7
    %v505 = vsub.s32 0, %v504
    %v506 = vrot.slane %v501, %v505
    %v508 = vadd.f32 %v500, %v506
    %vm509 = vcmp.gt.f32.partialorder %v508, 0.0
    %v510 = vmul.f32 %v508, 1.442695
    %v511 = vpow.pop %v510
    %v512 = vsub.f32 %v511, 1.0
    %v513 = vsel %vm509, %v508, %v512
    %s514 = scalar_lea.vmem %s1, 16
    %v515 = vld [vmem:[%s514] sm:$0xff]
    %v516 = vld [vmem:[%s514 + $0x8] sm:$0xff]
    %517 = vmatprep.subr.mxu0 0.0
    %518 = vmatpush1.msra.mxu0 0.0
    %519 = vmatprep.subr.mxu0 0.0
    %520 = vmatpush1.msra.mxu0 0.0
    %521 = vmatprep.subr.mxu0 0.0
    %522 = vmatpush1.msra.mxu0 0.0
    %523 = vmatprep.subr.mxu0 0.0
    %524 = vmatpush1.msra.mxu0 0.0
    %525 = vmatprep.subr.mxu0 0.0
    %526 = vmatpush1.msra.mxu0 0.0
    %527 = vmatprep.subr.mxu0 0.0
    %528 = vmatpush1.msra.mxu0 0.0
    %529 = vmatprep.subr.mxu0 0.0
    %530 = vmatpush1.msra.mxu0 0.0
    %531 = vmatprep.subr.mxu0 0.0
    %532 = vmatpush1.msra.mxu0 0.0
    %533 = vmatprep.subr.mxu0 0.0
    %534 = vmatpush1.msra.mxu0 0.0
    %535 = vmatprep.subr.mxu0 0.0
    %536 = vmatpush1.msra.mxu0 0.0
    %537 = vmatprep.subr.mxu0 0.0
    %538 = vmatpush1.msra.mxu0 0.0
    %539 = vmatprep.subr.mxu0 0.0
    %540 = vmatpush1.msra.mxu0 0.0
    %541 = vmatprep.subr.mxu0 0.0
    %542 = vmatpush1.msra.mxu0 0.0
    %543 = vmatprep.subr.mxu0 0.0
    %544 = vmatpush1.msra.mxu0 0.0
    %545 = vmatprep.subr.mxu0 0.0
    %546 = vmatpush1.msra.mxu0 %v516
    %547 = vmatprep.subr.mxu0 0.0
    %548 = vmatpush1.msra.mxu0 %v515
    %549 = vmatprep.subr.mxu0 0.0
    %550 = vmatpush2.msra.mxu0 0.0
    %551 = vmatprep.subr.mxu0 0.0
    %552 = vmatpush2.msra.mxu0 0.0
    %553 = vmatprep.subr.mxu0 0.0
    %554 = vmatpush2.msra.mxu0 0.0
    %555 = vmatprep.subr.mxu0 0.0
    %556 = vmatpush2.msra.mxu0 0.0
    %557 = vmatprep.subr.mxu0 0.0
    %558 = vmatpush2.msra.mxu0 0.0
    %559 = vmatprep.subr.mxu0 0.0
    %560 = vmatpush2.msra.mxu0 0.0
    %561 = vmatprep.subr.mxu0 0.0
    %562 = vmatpush2.msra.mxu0 0.0
    %563 = vmatprep.subr.mxu0 0.0
    %564 = vmatpush2.msra.mxu0 0.0
    %565 = vmatprep.subr.mxu0 0.0
    %566 = vmatpush2.msra.mxu0 0.0
    %567 = vmatprep.subr.mxu0 0.0
    %568 = vmatpush2.msra.mxu0 0.0
    %569 = vmatprep.subr.mxu0 0.0
    %570 = vmatpush2.msra.mxu0 0.0
    %571 = vmatprep.subr.mxu0 0.0
    %572 = vmatpush2.msra.mxu0 0.0
    %573 = vmatprep.subr.mxu0 0.0
    %574 = vmatpush2.msra.mxu0 0.0
    %575 = vmatprep.subr.mxu0 0.0
    %576 = vmatpush2.msra.mxu0 0.0
    %577 = vmatprep.subr.mxu0 0.0
    %578 = vmatpush2.msra.mxu0 0.0
    %579 = vmatprep.subr.mxu0 0.0
    %580 = vmatpush2.msra.mxu0 0.0
    %581 = vmatprep.mubr.f32.mxu0 0.0
    %582 = vmatmul.mubr.f32.gmra.mxu0 %v38
    %v583 = vpop.f32.mrf.mxu0
    %v584 = vadd.f32 0.0, %v583
    %v585 = vpop.f32.mrf.mxu0
    %586 = vdwg.mxu0
    %s587 = scalar_lea.vmem %s2, 16
    %v588 = vld [vmem:[%s587] sm:$0xff]
    %v589 = vld [vmem:[%s587 + $0x8] sm:$0xff]
    %v591 = vsel %vm36, %v584, 0
    %593 = vmatprep.subr.mxu0 0.0
    %594 = vmatpush1.msra.mxu0 0.0
    %595 = vmatprep.subr.mxu0 0.0
    %596 = vmatpush1.msra.mxu0 0.0
    %597 = vmatprep.subr.mxu0 0.0
    %598 = vmatpush1.msra.mxu0 0.0
    %599 = vmatprep.subr.mxu0 0.0
    %600 = vmatpush1.msra.mxu0 0.0
    %601 = vmatprep.subr.mxu0 0.0
    %602 = vmatpush1.msra.mxu0 0.0
    %603 = vmatprep.subr.mxu0 0.0
    %604 = vmatpush1.msra.mxu0 0.0
    %605 = vmatprep.subr.mxu0 0.0
    %606 = vmatpush1.msra.mxu0 0.0
    %607 = vmatprep.subr.mxu0 0.0
    %608 = vmatpush1.msra.mxu0 0.0
    %609 = vmatprep.subr.mxu0 0.0
    %610 = vmatpush1.msra.mxu0 0.0
    %611 = vmatprep.subr.mxu0 0.0
    %612 = vmatpush1.msra.mxu0 0.0
    %613 = vmatprep.subr.mxu0 0.0
    %614 = vmatpush1.msra.mxu0 0.0
    %615 = vmatprep.subr.mxu0 0.0
    %616 = vmatpush1.msra.mxu0 0.0
    %617 = vmatprep.subr.mxu0 0.0
    %618 = vmatpush1.msra.mxu0 0.0
    %619 = vmatprep.subr.mxu0 0.0
    %620 = vmatpush1.msra.mxu0 0.0
    %621 = vmatprep.subr.mxu0 0.0
    %622 = vmatpush1.msra.mxu0 %v589
    %623 = vmatprep.subr.mxu0 0.0
    %624 = vmatpush1.msra.mxu0 %v588
    %625 = vmatprep.subr.mxu0 0.0
    %626 = vmatpush2.msra.mxu0 0.0
    %627 = vmatprep.subr.mxu0 0.0
    %628 = vmatpush2.msra.mxu0 0.0
    %629 = vmatprep.subr.mxu0 0.0
    %630 = vmatpush2.msra.mxu0 0.0
    %631 = vmatprep.subr.mxu0 0.0
    %632 = vmatpush2.msra.mxu0 0.0
    %633 = vmatprep.subr.mxu0 0.0
    %634 = vmatpush2.msra.mxu0 0.0
    %635 = vmatprep.subr.mxu0 0.0
    %636 = vmatpush2.msra.mxu0 0.0
    %637 = vmatprep.subr.mxu0 0.0
    %638 = vmatpush2.msra.mxu0 0.0
    %639 = vmatprep.subr.mxu0 0.0
    %640 = vmatpush2.msra.mxu0 0.0
    %641 = vmatprep.subr.mxu0 0.0
    %642 = vmatpush2.msra.mxu0 0.0
    %643 = vmatprep.subr.mxu0 0.0
    %644 = vmatpush2.msra.mxu0 0.0
    %645 = vmatprep.subr.mxu0 0.0
    %646 = vmatpush2.msra.mxu0 0.0
    %647 = vmatprep.subr.mxu0 0.0
    %648 = vmatpush2.msra.mxu0 0.0
    %649 = vmatprep.subr.mxu0 0.0
    %650 = vmatpush2.msra.mxu0 0.0
    %651 = vmatprep.subr.mxu0 0.0
    %652 = vmatpush2.msra.mxu0 0.0
    %653 = vmatprep.subr.mxu0 0.0
    %654 = vmatpush2.msra.mxu0 0.0
    %655 = vmatprep.subr.mxu0 0.0
    %656 = vmatpush2.msra.mxu0 0.0
    %657 = vmatprep.mubr.f32.mxu0 0.0
    %658 = vmatmul.mubr.f32.gmra.mxu0 %v591
    %v659 = vpop.f32.mrf.mxu0
    %v660 = vadd.f32 0.0, %v659
    %v661 = vpop.f32.mrf.mxu0
    %662 = vdwg.mxu0
    %s663 = scalar_lea.vmem %s3, 16
    %v664 = vld [vmem:[%s663] sm:$0xff]
    %v665 = vld [vmem:[%s663 + $0x8] sm:$0xff]
    %666 = vmatprep.subr.mxu0 0.0
    %667 = vmatpush1.msra.mxu0 0.0
    %668 = vmatprep.subr.mxu0 0.0
    %669 = vmatpush1.msra.mxu0 0.0
    %670 = vmatprep.subr.mxu0 0.0
    %671 = vmatpush1.msra.mxu0 0.0
    %672 = vmatprep.subr.mxu0 0.0
    %673 = vmatpush1.msra.mxu0 0.0
    %674 = vmatprep.subr.mxu0 0.0
    %675 = vmatpush1.msra.mxu0 0.0
    %676 = vmatprep.subr.mxu0 0.0
    %677 = vmatpush1.msra.mxu0 0.0
    %678 = vmatprep.subr.mxu0 0.0
    %679 = vmatpush1.msra.mxu0 0.0
    %680 = vmatprep.subr.mxu0 0.0
    %681 = vmatpush1.msra.mxu0 0.0
    %682 = vmatprep.subr.mxu0 0.0
    %683 = vmatpush1.msra.mxu0 0.0
    %684 = vmatprep.subr.mxu0 0.0
    %685 = vmatpush1.msra.mxu0 0.0
    %686 = vmatprep.subr.mxu0 0.0
    %687 = vmatpush1.msra.mxu0 0.0
    %688 = vmatprep.subr.mxu0 0.0
    %689 = vmatpush1.msra.mxu0 0.0
    %690 = vmatprep.subr.mxu0 0.0
    %691 = vmatpush1.msra.mxu0 0.0
    %692 = vmatprep.subr.mxu0 0.0
    %693 = vmatpush1.msra.mxu0 0.0
    %694 = vmatprep.subr.mxu0 0.0
    %695 = vmatpush1.msra.mxu0 %v665
    %696 = vmatprep.subr.mxu0 0.0
    %697 = vmatpush1.msra.mxu0 %v664
    %698 = vmatprep.subr.mxu0 0.0
    %699 = vmatpush2.msra.mxu0 0.0
    %700 = vmatprep.subr.mxu0 0.0
    %701 = vmatpush2.msra.mxu0 0.0
    %702 = vmatprep.subr.mxu0 0.0
    %703 = vmatpush2.msra.mxu0 0.0
    %704 = vmatprep.subr.mxu0 0.0
    %705 = vmatpush2.msra.mxu0 0.0
    %706 = vmatprep.subr.mxu0 0.0
    %707 = vmatpush2.msra.mxu0 0.0
    %708 = vmatprep.subr.mxu0 0.0
    %709 = vmatpush2.msra.mxu0 0.0
    %710 = vmatprep.subr.mxu0 0.0
    %711 = vmatpush2.msra.mxu0 0.0
    %712 = vmatprep.subr.mxu0 0.0
    %713 = vmatpush2.msra.mxu0 0.0
    %714 = vmatprep.subr.mxu0 0.0
    %715 = vmatpush2.msra.mxu0 0.0
    %716 = vmatprep.subr.mxu0 0.0
    %717 = vmatpush2.msra.mxu0 0.0
    %718 = vmatprep.subr.mxu0 0.0
    %719 = vmatpush2.msra.mxu0 0.0
    %720 = vmatprep.subr.mxu0 0.0
    %721 = vmatpush2.msra.mxu0 0.0
    %722 = vmatprep.subr.mxu0 0.0
    %723 = vmatpush2.msra.mxu0 0.0
    %724 = vmatprep.subr.mxu0 0.0
    %725 = vmatpush2.msra.mxu0 0.0
    %726 = vmatprep.subr.mxu0 0.0
    %727 = vmatpush2.msra.mxu0 0.0
    %728 = vmatprep.subr.mxu0 0.0
    %729 = vmatpush2.msra.mxu0 0.0
    %730 = vmatprep.mubr.f32.mxu0 0.0
    %731 = vmatmul.mubr.f32.gmra.mxu0 %v591
    %v732 = vpop.f32.mrf.mxu0
    %v733 = vadd.f32 0.0, %v732
    %v734 = vpop.f32.mrf.mxu0
    %735 = vdwg.mxu0
    %736 = vxpose.xlu0.b32.start [1/16] %v660, 128
    %737 = vxpose.xlu0.b32.cont [2/16] 0.0, 128
    %738 = vxpose.xlu0.b32.cont [3/16] 0.0, 128
    %739 = vxpose.xlu0.b32.cont [4/16] 0.0, 128
    %740 = vxpose.xlu0.b32.cont [5/16] 0.0, 128
    %741 = vxpose.xlu0.b32.cont [6/16] 0.0, 128
    %742 = vxpose.xlu0.b32.cont [7/16] 0.0, 128
    %743 = vxpose.xlu0.b32.cont [8/16] 0.0, 128
    %744 = vxpose.xlu0.b32.cont [9/16] 0.0, 128
    %745 = vxpose.xlu0.b32.cont [10/16] 0.0, 128
    %746 = vxpose.xlu0.b32.cont [11/16] 0.0, 128
    %747 = vxpose.xlu0.b32.cont [12/16] 0.0, 128
    %748 = vxpose.xlu0.b32.cont [13/16] 0.0, 128
    %749 = vxpose.xlu0.b32.cont [14/16] 0.0, 128
    %750 = vxpose.xlu0.b32.cont [15/16] 0.0, 128
    %751 = vxpose.xlu0.b32.end [16/16] 0.0, 128
    %v752 = vpop.trf.xlu0
    %v753 = vpop.trf.xlu0
    %v754 = vpop.trf.xlu0
    %v755 = vpop.trf.xlu0
    %v756 = vpop.trf.xlu0
    %v757 = vpop.trf.xlu0
    %v758 = vpop.trf.xlu0
    %v759 = vpop.trf.xlu0
    %v760 = vpop.trf.xlu0
    %v761 = vpop.trf.xlu0
    %v762 = vpop.trf.xlu0
    %v763 = vpop.trf.xlu0
    %v764 = vpop.trf.xlu0
    %v765 = vpop.trf.xlu0
    %v766 = vpop.trf.xlu0
    %v767 = vpop.trf.xlu0
    %s768 = scalar_lea.vmem %s5, 8
    %v769 = vld [vmem:[%s768] sm:$0xff]
    %vm770 = vcmp.ne.f32.partialorder %v769, 0.0
    %772 = vset.pattern.permute.xlu0 0
    %773 = vperm.xlu0 %772, %v733
    %v774 = vpop.permute.xlu0 %773
    %v776 = vlaneseq
    %v777 = vshrl.u32 %v776, 7
    %v778 = vsub.s32 0, %v777
    %v779 = vrot.slane %v752, %v778
    %v780 = vadd.f32 %v774, %v779
    %v781 = vmul.f32 %v780, %v769
    %vm782 = vcmp.ge.f32.partialorder %v781, 0.0
    %v783 = vmul.f32 %v781, 0.2
    %v784 = vsel %vm782, %v781, %v783
    %v785 = vsel %vm770, %v784, -1e+30
    %v786 = vsel %vm306, %v785, -inf
    %787 = vmax.xlane.f32.xlu0 %v786
    %v788 = vpop.xlane.xlu0 %787
    %v789 = vsub.f32 %v785, %v788
    %v790 = vmul.f32 %v789, 1.442695
    %v791 = vpow.pop %v790
    %v792 = vsel %vm770, %v791, 0.0
    %v793 = vsel %vm306, %v792, 0.0
    %794 = vadd.xlane.f32.xlu0 %v793
    %v795 = vpop.xlane.xlu0 %794
    %v796 = vmax.f32 %v795, 1e-30
    %v797 = vrcp.pop %v796
    %v798 = vmul.f32 %v792, %v797
    %v800 = vsel %vm306, %v798, 0
    %802 = vmatprep.subr.mxu0 0.0
    %803 = vmatpush1.msra.mxu0 0.0
    %804 = vmatprep.subr.mxu0 0.0
    %805 = vmatpush1.msra.mxu0 0.0
    %806 = vmatprep.subr.mxu0 0.0
    %807 = vmatpush1.msra.mxu0 0.0
    %808 = vmatprep.subr.mxu0 0.0
    %809 = vmatpush1.msra.mxu0 0.0
    %810 = vmatprep.subr.mxu0 0.0
    %811 = vmatpush1.msra.mxu0 0.0
    %812 = vmatprep.subr.mxu0 0.0
    %813 = vmatpush1.msra.mxu0 0.0
    %814 = vmatprep.subr.mxu0 0.0
    %815 = vmatpush1.msra.mxu0 0.0
    %816 = vmatprep.subr.mxu0 0.0
    %817 = vmatpush1.msra.mxu0 0.0
    %818 = vmatprep.subr.mxu0 0.0
    %819 = vmatpush1.msra.mxu0 0.0
    %820 = vmatprep.subr.mxu0 0.0
    %821 = vmatpush1.msra.mxu0 0.0
    %822 = vmatprep.subr.mxu0 0.0
    %823 = vmatpush1.msra.mxu0 0.0
    %824 = vmatprep.subr.mxu0 0.0
    %825 = vmatpush1.msra.mxu0 0.0
    %826 = vmatprep.subr.mxu0 0.0
    %827 = vmatpush1.msra.mxu0 0.0
    %828 = vmatprep.subr.mxu0 0.0
    %829 = vmatpush1.msra.mxu0 0.0
    %830 = vmatprep.subr.mxu0 0.0
    %831 = vmatpush1.msra.mxu0 0.0
    %832 = vmatprep.subr.mxu0 0.0
    %833 = vmatpush1.msra.mxu0 %v584
    %834 = vmatprep.subr.mxu0 0.0
    %835 = vmatpush2.msra.mxu0 0.0
    %836 = vmatprep.subr.mxu0 0.0
    %837 = vmatpush2.msra.mxu0 0.0
    %838 = vmatprep.subr.mxu0 0.0
    %839 = vmatpush2.msra.mxu0 0.0
    %840 = vmatprep.subr.mxu0 0.0
    %841 = vmatpush2.msra.mxu0 0.0
    %842 = vmatprep.subr.mxu0 0.0
    %843 = vmatpush2.msra.mxu0 0.0
    %844 = vmatprep.subr.mxu0 0.0
    %845 = vmatpush2.msra.mxu0 0.0
    %846 = vmatprep.subr.mxu0 0.0
    %847 = vmatpush2.msra.mxu0 0.0
    %848 = vmatprep.subr.mxu0 0.0
    %849 = vmatpush2.msra.mxu0 0.0
    %850 = vmatprep.subr.mxu0 0.0
    %851 = vmatpush2.msra.mxu0 0.0
    %852 = vmatprep.subr.mxu0 0.0
    %853 = vmatpush2.msra.mxu0 0.0
    %854 = vmatprep.subr.mxu0 0.0
    %855 = vmatpush2.msra.mxu0 0.0
    %856 = vmatprep.subr.mxu0 0.0
    %857 = vmatpush2.msra.mxu0 0.0
    %858 = vmatprep.subr.mxu0 0.0
    %859 = vmatpush2.msra.mxu0 0.0
    %860 = vmatprep.subr.mxu0 0.0
    %861 = vmatpush2.msra.mxu0 0.0
    %862 = vmatprep.subr.mxu0 0.0
    %863 = vmatpush2.msra.mxu0 0.0
    %864 = vmatprep.subr.mxu0 0.0
    %865 = vmatpush2.msra.mxu0 0.0
    %866 = vmatprep.mubr.f32.mxu0 0.0
    %867 = vmatmul.mubr.f32.gmra.mxu0 %v800
    %v868 = vpop.f32.mrf.mxu0
    %v869 = vadd.f32 0.0, %v868
    %v870 = vpop.f32.mrf.mxu0
    %871 = vdwg.mxu0
    %872 = vset.pattern.permute.xlu0 1
    %873 = vperm.xlu0 %872, %v733
    %v874 = vpop.permute.xlu0 %873
    %v876 = vlaneseq
    %v877 = vshrl.u32 %v876, 7
    %v878 = vsub.s32 1, %v877
    %v879 = vrot.slane %v752, %v878
    %v880 = vadd.f32 %v874, %v879
    %v881 = vmul.f32 %v880, %v769
    %vm882 = vcmp.ge.f32.partialorder %v881, 0.0
    %v883 = vmul.f32 %v881, 0.2
    %v884 = vsel %vm882, %v881, %v883
    %v885 = vsel %vm770, %v884, -1e+30
    %v886 = vsel %vm306, %v885, -inf
    %887 = vmax.xlane.f32.xlu0 %v886
    %v888 = vpop.xlane.xlu0 %887
    %v889 = vsub.f32 %v885, %v888
    %v890 = vmul.f32 %v889, 1.442695
    %v891 = vpow.pop %v890
    %v892 = vsel %vm770, %v891, 0.0
    %v893 = vsel %vm306, %v892, 0.0
    %894 = vadd.xlane.f32.xlu0 %v893
    %v895 = vpop.xlane.xlu0 %894
    %v896 = vmax.f32 %v895, 1e-30
    %v897 = vrcp.pop %v896
    %v898 = vmul.f32 %v892, %v897
    %899 = vrot.lane.b32.xlu0 %v584, 120
    %v900 = vpop.permute.xlu0 %899
    %v903 = vsel %vm306, %v898, 0
    %905 = vmatprep.subr.mxu0 0.0
    %906 = vmatpush1.msra.mxu0 0.0
    %907 = vmatprep.subr.mxu0 0.0
    %908 = vmatpush1.msra.mxu0 0.0
    %909 = vmatprep.subr.mxu0 0.0
    %910 = vmatpush1.msra.mxu0 0.0
    %911 = vmatprep.subr.mxu0 0.0
    %912 = vmatpush1.msra.mxu0 0.0
    %913 = vmatprep.subr.mxu0 0.0
    %914 = vmatpush1.msra.mxu0 0.0
    %915 = vmatprep.subr.mxu0 0.0
    %916 = vmatpush1.msra.mxu0 0.0
    %917 = vmatprep.subr.mxu0 0.0
    %918 = vmatpush1.msra.mxu0 0.0
    %919 = vmatprep.subr.mxu0 0.0
    %920 = vmatpush1.msra.mxu0 0.0
    %921 = vmatprep.subr.mxu0 0.0
    %922 = vmatpush1.msra.mxu0 0.0
    %923 = vmatprep.subr.mxu0 0.0
    %924 = vmatpush1.msra.mxu0 0.0
    %925 = vmatprep.subr.mxu0 0.0
    %926 = vmatpush1.msra.mxu0 0.0
    %927 = vmatprep.subr.mxu0 0.0
    %928 = vmatpush1.msra.mxu0 0.0
    %929 = vmatprep.subr.mxu0 0.0
    %930 = vmatpush1.msra.mxu0 0.0
    %931 = vmatprep.subr.mxu0 0.0
    %932 = vmatpush1.msra.mxu0 0.0
    %933 = vmatprep.subr.mxu0 0.0
    %934 = vmatpush1.msra.mxu0 0.0
    %935 = vmatprep.subr.mxu0 0.0
    %936 = vmatpush1.msra.mxu0 %v900
    %937 = vmatprep.subr.mxu0 0.0
    %938 = vmatpush2.msra.mxu0 0.0
    %939 = vmatprep.subr.mxu0 0.0
    %940 = vmatpush2.msra.mxu0 0.0
    %941 = vmatprep.subr.mxu0 0.0
    %942 = vmatpush2.msra.mxu0 0.0
    %943 = vmatprep.subr.mxu0 0.0
    %944 = vmatpush2.msra.mxu0 0.0
    %945 = vmatprep.subr.mxu0 0.0
    %946 = vmatpush2.msra.mxu0 0.0
    %947 = vmatprep.subr.mxu0 0.0
    %948 = vmatpush2.msra.mxu0 0.0
    %949 = vmatprep.subr.mxu0 0.0
    %950 = vmatpush2.msra.mxu0 0.0
    %951 = vmatprep.subr.mxu0 0.0
    %952 = vmatpush2.msra.mxu0 0.0
    %953 = vmatprep.subr.mxu0 0.0
    %954 = vmatpush2.msra.mxu0 0.0
    %955 = vmatprep.subr.mxu0 0.0
    %956 = vmatpush2.msra.mxu0 0.0
    %957 = vmatprep.subr.mxu0 0.0
    %958 = vmatpush2.msra.mxu0 0.0
    %959 = vmatprep.subr.mxu0 0.0
    %960 = vmatpush2.msra.mxu0 0.0
    %961 = vmatprep.subr.mxu0 0.0
    %962 = vmatpush2.msra.mxu0 0.0
    %963 = vmatprep.subr.mxu0 0.0
    %964 = vmatpush2.msra.mxu0 0.0
    %965 = vmatprep.subr.mxu0 0.0
    %966 = vmatpush2.msra.mxu0 0.0
    %967 = vmatprep.subr.mxu0 0.0
    %968 = vmatpush2.msra.mxu0 0.0
    %969 = vmatprep.mubr.f32.mxu0 0.0
    %970 = vmatmul.mubr.f32.gmra.mxu0 %v903
    %v971 = vpop.f32.mrf.mxu0
    %v972 = vadd.f32 0.0, %v971
    %v973 = vpop.f32.mrf.mxu0
    %974 = vdwg.mxu0
    %976 = vrot.lane.b32.xlu0 %v972, 8
    %v977 = vpop.permute.xlu0 %976
    %v979 = vsel %vm306, %v869, %v977
    %s980 = scalar_lea.vmem %s4, 1
    %v981 = vld [vmem:[%s980] sm:$0x1]
    %v983 = vlaneseq
    %v984 = vshrl.u32 %v983, 7
    %v985 = vsub.s32 0, %v984
    %v986 = vrot.slane %v981, %v985
    %v988 = vadd.f32 %v979, %v986
    %vm989 = vcmp.gt.f32.partialorder %v988, 0.0
    %v990 = vmul.f32 %v988, 1.442695
    %v991 = vpow.pop %v990
    %v992 = vsub.f32 %v991, 1.0
    %v993 = vsel %vm989, %v988, %v992
    %v994 = vld [vmem:[%s6] sm:$0xff]
    %v995 = vld [vmem:[%s6 + $0x8] sm:$0xff]
    %v996 = vld [vmem:[%s7] sm:$0x1]
    %v998 = vlaneseq
    %v999 = vshrl.u32 %v998, 7
    %v1000 = vsub.s32 0, %v999
    %v1001 = vrot.slane %v996, %v1000
    %v1004 = vsel %vm36, %v513, 0
    %v1007 = vsel %vm36, %v993, 0
    %1009 = vmatprep.subr.mxu0 0.0
    %1010 = vmatpush1.msra.mxu0 0.0
    %1011 = vmatprep.subr.mxu0 0.0
    %1012 = vmatpush1.msra.mxu0 0.0
    %1013 = vmatprep.subr.mxu0 0.0
    %1014 = vmatpush1.msra.mxu0 0.0
    %1015 = vmatprep.subr.mxu0 0.0
    %1016 = vmatpush1.msra.mxu0 0.0
    %1017 = vmatprep.subr.mxu0 0.0
    %1018 = vmatpush1.msra.mxu0 0.0
    %1019 = vmatprep.subr.mxu0 0.0
    %1020 = vmatpush1.msra.mxu0 0.0
    %1021 = vmatprep.subr.mxu0 0.0
    %1022 = vmatpush1.msra.mxu0 0.0
    %1023 = vmatprep.subr.mxu0 0.0
    %1024 = vmatpush1.msra.mxu0 0.0
    %1025 = vmatprep.subr.mxu0 0.0
    %1026 = vmatpush1.msra.mxu0 0.0
    %1027 = vmatprep.subr.mxu0 0.0
    %1028 = vmatpush1.msra.mxu0 0.0
    %1029 = vmatprep.subr.mxu0 0.0
    %1030 = vmatpush1.msra.mxu0 0.0
    %1031 = vmatprep.subr.mxu0 0.0
    %1032 = vmatpush1.msra.mxu0 0.0
    %1033 = vmatprep.subr.mxu0 0.0
    %1034 = vmatpush1.msra.mxu0 0.0
    %1035 = vmatprep.subr.mxu0 0.0
    %1036 = vmatpush1.msra.mxu0 0.0
    %1037 = vmatprep.subr.mxu0 0.0
    %1038 = vmatpush1.msra.mxu0 %v995
    %1039 = vmatprep.subr.mxu0 0.0
    %1040 = vmatpush1.msra.mxu0 %v994
    %1041 = vmatprep.subr.mxu0 0.0
    %1042 = vmatpush2.msra.mxu0 0.0
    %1043 = vmatprep.subr.mxu0 0.0
    %1044 = vmatpush2.msra.mxu0 0.0
    %1045 = vmatprep.subr.mxu0 0.0
    %1046 = vmatpush2.msra.mxu0 0.0
    %1047 = vmatprep.subr.mxu0 0.0
    %1048 = vmatpush2.msra.mxu0 0.0
    %1049 = vmatprep.subr.mxu0 0.0
    %1050 = vmatpush2.msra.mxu0 0.0
    %1051 = vmatprep.subr.mxu0 0.0
    %1052 = vmatpush2.msra.mxu0 0.0
    %1053 = vmatprep.subr.mxu0 0.0
    %1054 = vmatpush2.msra.mxu0 0.0
    %1055 = vmatprep.subr.mxu0 0.0
    %1056 = vmatpush2.msra.mxu0 0.0
    %1057 = vmatprep.subr.mxu0 0.0
    %1058 = vmatpush2.msra.mxu0 0.0
    %1059 = vmatprep.subr.mxu0 0.0
    %1060 = vmatpush2.msra.mxu0 0.0
    %1061 = vmatprep.subr.mxu0 0.0
    %1062 = vmatpush2.msra.mxu0 0.0
    %1063 = vmatprep.subr.mxu0 0.0
    %1064 = vmatpush2.msra.mxu0 0.0
    %1065 = vmatprep.subr.mxu0 0.0
    %1066 = vmatpush2.msra.mxu0 0.0
    %1067 = vmatprep.subr.mxu0 0.0
    %1068 = vmatpush2.msra.mxu0 0.0
    %1069 = vmatprep.subr.mxu0 0.0
    %1070 = vmatpush2.msra.mxu0 0.0
    %1071 = vmatprep.subr.mxu0 0.0
    %1072 = vmatpush2.msra.mxu0 0.0
    %1073 = vmatprep.mubr.f32.mxu0 0.0
    %1074 = vmatmul.mubr.f32.gmra.mxu0 %v1004
    %v1075 = vpop.f32.mrf.mxu0
    %v1076 = vadd.f32 %v1001, %v1075
    %v1077 = vpop.f32.mrf.mxu0
    %1078 = vmatprep.mubr.f32.mxu0 0.0
    %1079 = vmatmul.mubr.f32.gmra.mxu0 %v1007
    %v1080 = vpop.f32.mrf.mxu0
    %v1081 = vadd.f32 %v1001, %v1080
    %v1082 = vpop.f32.mrf.mxu0
    %1083 = vdwg.mxu0
    %v1084 = vtanh.pop %v1076
    %v1085 = vtanh.pop %v1081
    %v1086 = vld [vmem:[%s8] sm:$0xff]
    %v1087 = vld [vmem:[%s8 + $0x8] sm:$0xff]
    %v1088 = vld [vmem:[%s8 + $0x10] sm:$0xff]
    %v1089 = vld [vmem:[%s8 + $0x18] sm:$0xff]
    %v1090 = vld [vmem:[%s8 + $0x20] sm:$0xff]
    %v1091 = vld [vmem:[%s8 + $0x28] sm:$0xff]
    %v1092 = vld [vmem:[%s8 + $0x30] sm:$0xff]
    %v1093 = vld [vmem:[%s8 + $0x38] sm:$0xff]
    %v1094 = vld [vmem:[%s8 + $0x40] sm:$0xff]
    %v1095 = vld [vmem:[%s8 + $0x48] sm:$0xff]
    %v1096 = vld [vmem:[%s8 + $0x50] sm:$0xff]
    %v1097 = vld [vmem:[%s8 + $0x58] sm:$0xff]
    %v1098 = vld [vmem:[%s8 + $0x60] sm:$0xff]
    %v1099 = vld [vmem:[%s8 + $0x68] sm:$0xff]
    %v1100 = vld [vmem:[%s8 + $0x70] sm:$0xff]
    %v1101 = vld [vmem:[%s8 + $0x78] sm:$0xff]
    %1102 = vmatprep.subr.mxu0 0.0
    %1103 = vmatpush1.msra.mxu0 %v1101
    %1104 = vmatprep.subr.mxu0 0.0
    %1105 = vmatpush1.msra.mxu0 %v1100
    %1106 = vmatprep.subr.mxu0 0.0
    %1107 = vmatpush1.msra.mxu0 %v1099
    %1108 = vmatprep.subr.mxu0 0.0
    %1109 = vmatpush1.msra.mxu0 %v1098
    %1110 = vmatprep.subr.mxu0 0.0
    %1111 = vmatpush1.msra.mxu0 %v1097
    %1112 = vmatprep.subr.mxu0 0.0
    %1113 = vmatpush1.msra.mxu0 %v1096
    %1114 = vmatprep.subr.mxu0 0.0
    %1115 = vmatpush1.msra.mxu0 %v1095
    %1116 = vmatprep.subr.mxu0 0.0
    %1117 = vmatpush1.msra.mxu0 %v1094
    %1118 = vmatprep.subr.mxu0 0.0
    %1119 = vmatpush1.msra.mxu0 %v1093
    %1120 = vmatprep.subr.mxu0 0.0
    %1121 = vmatpush1.msra.mxu0 %v1092
    %1122 = vmatprep.subr.mxu0 0.0
    %1123 = vmatpush1.msra.mxu0 %v1091
    %1124 = vmatprep.subr.mxu0 0.0
    %1125 = vmatpush1.msra.mxu0 %v1090
    %1126 = vmatprep.subr.mxu0 0.0
    %1127 = vmatpush1.msra.mxu0 %v1089
    %1128 = vmatprep.subr.mxu0 0.0
    %1129 = vmatpush1.msra.mxu0 %v1088
    %1130 = vmatprep.subr.mxu0 0.0
    %1131 = vmatpush1.msra.mxu0 %v1087
    %1132 = vmatprep.subr.mxu0 0.0
    %1133 = vmatpush1.msra.mxu0 %v1086
    %1134 = vmatprep.subr.mxu0 0.0
    %1135 = vmatpush2.msra.mxu0 0.0
    %1136 = vmatprep.subr.mxu0 0.0
    %1137 = vmatpush2.msra.mxu0 0.0
    %1138 = vmatprep.subr.mxu0 0.0
    %1139 = vmatpush2.msra.mxu0 0.0
    %1140 = vmatprep.subr.mxu0 0.0
    %1141 = vmatpush2.msra.mxu0 0.0
    %1142 = vmatprep.subr.mxu0 0.0
    %1143 = vmatpush2.msra.mxu0 0.0
    %1144 = vmatprep.subr.mxu0 0.0
    %1145 = vmatpush2.msra.mxu0 0.0
    %1146 = vmatprep.subr.mxu0 0.0
    %1147 = vmatpush2.msra.mxu0 0.0
    %1148 = vmatprep.subr.mxu0 0.0
    %1149 = vmatpush2.msra.mxu0 0.0
    %1150 = vmatprep.subr.mxu0 0.0
    %1151 = vmatpush2.msra.mxu0 0.0
    %1152 = vmatprep.subr.mxu0 0.0
    %1153 = vmatpush2.msra.mxu0 0.0
    %1154 = vmatprep.subr.mxu0 0.0
    %1155 = vmatpush2.msra.mxu0 0.0
    %1156 = vmatprep.subr.mxu0 0.0
    %1157 = vmatpush2.msra.mxu0 0.0
    %1158 = vmatprep.subr.mxu0 0.0
    %1159 = vmatpush2.msra.mxu0 0.0
    %1160 = vmatprep.subr.mxu0 0.0
    %1161 = vmatpush2.msra.mxu0 0.0
    %1162 = vmatprep.subr.mxu0 0.0
    %1163 = vmatpush2.msra.mxu0 0.0
    %1164 = vmatprep.subr.mxu0 0.0
    %1165 = vmatpush2.msra.mxu0 0.0
    %1166 = vmatprep.mubr.f32.mxu0 0.0
    %1167 = vmatmul.mubr.f32.gmra.mxu0 %v1084
    %v1168 = vpop.f32.mrf.mxu0
    %v1169 = vadd.f32 0.0, %v1168
    %v1170 = vpop.f32.mrf.mxu0
    %1171 = vmatprep.mubr.f32.mxu0 0.0
    %1172 = vmatmul.mubr.f32.gmra.mxu0 %v1085
    %v1173 = vpop.f32.mrf.mxu0
    %v1174 = vadd.f32 0.0, %v1173
    %v1175 = vpop.f32.mrf.mxu0
    %1176 = vdwg.mxu0
    %vm1177 = vcmask 7168
    %v1178 = vsel %vm1177, %v1169, 0.0
    %1179 = vadd.xlane.f32.xlu0 %v1178
    %v1180 = vpop.xlane.xlu0 %1179
    %v1181 = vrot.slane %v1180, 4
    %v1182 = vadd.f32 %v1180, %v1181
    %v1183 = vrot.slane %v1182, 2
    %v1184 = vadd.f32 %v1182, %v1183
    %v1185 = vrot.slane %v1184, 1
    %v1186 = vadd.f32 %v1184, %v1185
    %s1187 = vtos %v1186
    %v1188 = vstv %s1187
    %v1189 = vrcp.pop 8.0
    %v1190 = vmul.f32 %v1188, %v1189
    %v1191 = vsel %vm1177, %v1174, 0.0
    %1192 = vadd.xlane.f32.xlu0 %v1191
    %v1193 = vpop.xlane.xlu0 %1192
    %v1194 = vrot.slane %v1193, 4
    %v1195 = vadd.f32 %v1193, %v1194
    %v1196 = vrot.slane %v1195, 2
    %v1197 = vadd.f32 %v1195, %v1196
    %v1198 = vrot.slane %v1197, 1
    %v1199 = vadd.f32 %v1197, %v1198
    %s1200 = vtos %v1199
    %v1201 = vstv %s1200
    %v1202 = vmul.f32 %v1201, %v1189
    %v1203 = vmax.f32 %v1190, %v1202
    %v1204 = vsub.f32 %v1190, %v1203
    %v1205 = vmul.f32 %v1204, 1.442695
    %v1206 = vpow.pop %v1205
    %v1207 = vsub.f32 %v1202, %v1203
    %v1208 = vmul.f32 %v1207, 1.442695
    %v1209 = vpow.pop %v1208
    %v1210 = vadd.f32 %v1206, %v1209
    %v1211 = vrcp.pop %v1210
    %v1212 = vmul.f32 %v1206, %v1211
    %v1213 = vmul.f32 %v1212, %v513
    %v1214 = vmul.f32 %v1209, %v1211
    %v1215 = vmul.f32 %v1214, %v993
    %v1216 = vadd.f32 %v1213, %v1215
    %1217 = vst.msk [vmem:[#allocation2] sm:$0xff] %vm36, %v1216
    // Predicated region
    $region38: #{tpu_custom_call.1} parent=1 // pred_check
      _
    $region39: #{tpu_custom_call.1} parent=1 // pred_check_branch
      %1219 = sbr.rel (0) target = $region41
    $region40: #{tpu_custom_call.1} parent=1 // pred_region
      %s1221 = ssub.s32 128, 128
      %1222 = vsyncadd [#allocation3], %s1221
      %s1224 = sshll.u32 [#allocation2], 4
      %s1225 = int_to_ptr.vmem [resolvable:$true] %s1224
      %1227 = dma.vmem_to_hbm [thread:$0]  %s1225, 128, %s9, [#allocation3]
    $region41: #{tpu_custom_call.1} parent=1 // pred_fallthru
      _
    // Predicated region
    $region42: #{tpu_custom_call.1} parent=1 // pred_check
      _
    $region43: #{tpu_custom_call.1} parent=1 // pred_check_branch
      %1229 = sbr.rel (0) target = $region45
    $region44: #{tpu_custom_call.1} parent=1 // pred_region
      %1230 = dma.done [#allocation3], 128
    $region45: #{tpu_custom_call.1} parent=1 // pred_fallthru
      _
    %1231 = vsyncpa [#allocation3], 1

</llo_original>
